<compile_context>
chip_gen: v5e
topology: v5e:2x2
jax: 0.10.0
libtpu: 0.0.40
codegen_flags: <defaults>
</compile_context>

<pallas_src>
import functools

import jax
import jax.numpy as jnp
from jax import lax
from jax.experimental import pallas as pl
from jax.experimental.pallas import tpu as pltpu


# ----------------------------- config ---------------------------------------
VOCAB_SIZE = 128
BLOCK_SIZE = 8       # max sequence length
N_LAYER = 2
N_HEAD = 4
N_EMBD = 32
HEAD_SIZE = N_EMBD // N_HEAD
LN_EPS = 1e-5
NEG_INF = -1e30      # additive causal-mask bias (avoids -inf arithmetic)


# --------------------------- kernel helpers ----------------------------------
def _layernorm(x, gamma, beta):
    # x: (T, C); gamma/beta: (1, C). Matches torch.nn.LayerNorm (biased var), f32.
    mu = jnp.mean(x, axis=-1, keepdims=True)
    var = jnp.mean((x - mu) ** 2, axis=-1, keepdims=True)
    return (x - mu) * lax.rsqrt(var + LN_EPS) * gamma + beta


# --------------------------- fused GPT kernel --------------------------------
# One grid step == one batch element. All layers + final LN + lm_head run here.
def _gpt_kernel(n_layer, n_head, head_size,
                x_ref,
                ln1g_ref, ln1b_ref, wqkv_ref, wo_ref, bo_ref,
                ln2g_ref, ln2b_ref, w1_ref, b1_ref, w2_ref, b2_ref,
                lnfg_ref, lnfb_ref, hw_ref, hb_ref,
                o_ref):
    x = x_ref[0]                     # (T, C) residual stream, f32
    T, C = x.shape

    # NOTE: reference scales attention scores by full embedding dim C (not head_size).
    scale = 1.0 / (C ** 0.5)

    # Additive causal bias (0 on/below diagonal, -1e30 above), built once.
    row = lax.broadcasted_iota(jnp.int32, (T, T), 0)
    col = lax.broadcasted_iota(jnp.int32, (T, T), 1)
    causal_bias = jnp.where(col <= row, 0.0, NEG_INF).astype(jnp.float32)

    for li in range(n_layer):                 # static Python loop over layers
        # ---- attention branch: x + MHA(LN1(x)) ----
        h = _layernorm(x, ln1g_ref[li], ln1b_ref[li])
        # Fused q/k/v projection: one (T,C) x (C,3C) matmul.
        qkv = jnp.dot(h, wqkv_ref[li], preferred_element_type=jnp.float32)   # (T, 3C)

        head_outs = []
        for hh in range(n_head):
            lo = hh * head_size
            qs = qkv[:, lo:lo + head_size]                    # (T, hs)
            ks = qkv[:, C + lo:C + lo + head_size]
            vs = qkv[:, 2 * C + lo:2 * C + lo + head_size]
            wei = jnp.dot(qs, ks.T, preferred_element_type=jnp.float32) * scale
            wei = wei + causal_bias
            wei = wei - jnp.max(wei, axis=-1, keepdims=True)
            p = jnp.exp(wei)
            # EUP reciprocal (separate VLIW slot) instead of a VALU divide.
            p = p * pl.reciprocal(jnp.sum(p, axis=-1, keepdims=True), approx=True)
            head_outs.append(jnp.dot(p, vs, preferred_element_type=jnp.float32))
        attn = jnp.concatenate(head_outs, axis=-1)                            # (T, C)
        attn = jnp.dot(attn, wo_ref[li], preferred_element_type=jnp.float32) + bo_ref[li]
        x = x + attn

        # ---- MLP branch: x + FF(LN2(x)) ----
        h2 = _layernorm(x, ln2g_ref[li], ln2b_ref[li])
        ff = jnp.dot(h2, w1_ref[li], preferred_element_type=jnp.float32) + b1_ref[li]
        ff = jnp.maximum(ff, 0.0)
        ff = jnp.dot(ff, w2_ref[li], preferred_element_type=jnp.float32) + b2_ref[li]
        x = x + ff

    # ---- final layernorm + lm_head (lane-dense V=128 output, only HBM store) ----
    h = _layernorm(x, lnfg_ref[...], lnfb_ref[...])
    o_ref[0] = jnp.dot(h, hw_ref[...], preferred_element_type=jnp.float32) + hb_ref[...]


# ------------------------------ forward --------------------------------------
def gpt_forward(params, idx):
    """idx: (B, T) int32 token ids. Returns logits (B, T, vocab)."""
    B, T = idx.shape
    C = N_EMBD
    V = VOCAB_SIZE

    # Embedding gathers + positional add are plain-JAX glue.
    tok_emb = jnp.take(params["tok_emb"], idx, axis=0)        # (B, T, C)
    pos_emb = params["pos_emb"][:T]                           # (T, C)
    x = tok_emb + pos_emb[None, :, :]

    w = params["stacked"]
    weights = [
        w["ln1_g"], w["ln1_b"], w["wqkv"], w["wo"], w["bo"],
        w["ln2_g"], w["ln2_b"], w["w1"], w["b1"], w["w2"], w["b2"],
        params["lnf_g"], params["lnf_b"], params["head_w"], params["head_b"],
    ]

    def full_spec(a):
        nd = a.ndim
        return pl.BlockSpec(a.shape, lambda b, _nd=nd: (0,) * _nd)

    kernel = functools.partial(_gpt_kernel, N_LAYER, N_HEAD, HEAD_SIZE)
    return pl.pallas_call(
        kernel,
        out_shape=jax.ShapeDtypeStruct((B, T, V), jnp.float32),
        grid=(B,),
        in_specs=[pl.BlockSpec((1, T, C), lambda b: (b, 0, 0))]
                 + [full_spec(a) for a in weights],
        out_specs=pl.BlockSpec((1, T, V), lambda b: (b, 0, 0)),
        compiler_params=pltpu.CompilerParams(
            dimension_semantics=("parallel",)),
    )(x, *weights)
    # TODO(synk): cross-entropy loss path (targets != None) not implemented; forward
    # with targets=None returns (logits, None), which is what this reproduces.


# ------------------------------ parameters -----------------------------------
def _linear_init(key, fan_in, fan_out, bias=True):
    # Mimic torch nn.Linear default: U(-1/sqrt(fan_in), 1/sqrt(fan_in)).
    kw, kb = jax.random.split(key)
    bound = 1.0 / (fan_in ** 0.5)
    w = jax.random.uniform(kw, (fan_in, fan_out), jnp.float32, -bound, bound)
    if not bias:
        return w, None
    b = jax.random.uniform(kb, (1, fan_out), jnp.float32, -bound, bound)
    return w, b


def init_params(key):
    keys = jax.random.split(key, 4 + N_LAYER)
    params = {
        "tok_emb": jax.random.normal(keys[0], (VOCAB_SIZE, N_EMBD), jnp.float32),
        "pos_emb": jax.random.normal(keys[1], (BLOCK_SIZE, N_EMBD), jnp.float32),
        "lnf_g": jnp.ones((1, N_EMBD), jnp.float32),
        "lnf_b": jnp.zeros((1, N_EMBD), jnp.float32),
    }
    params["head_w"], params["head_b"] = _linear_init(keys[2], N_EMBD, VOCAB_SIZE)

    layers = []
    for li in range(N_LAYER):
        lk = jax.random.split(keys[4 + li], 8)
        # per-head q/k/v weights (no bias), stacked column-wise into (C, C)
        wq, _ = _linear_init(lk[0], N_EMBD, N_EMBD, bias=False)
        wk, _ = _linear_init(lk[1], N_EMBD, N_EMBD, bias=False)
        wv, _ = _linear_init(lk[2], N_EMBD, N_EMBD, bias=False)
        wo, bo = _linear_init(lk[3], N_EMBD, N_EMBD)
        w1, b1 = _linear_init(lk[4], N_EMBD, 4 * N_EMBD)
        w2, b2 = _linear_init(lk[5], 4 * N_EMBD, N_EMBD)
        layers.append({
            "ln1_g": jnp.ones((1, N_EMBD), jnp.float32),
            "ln1_b": jnp.zeros((1, N_EMBD), jnp.float32),
            "ln2_g": jnp.ones((1, N_EMBD), jnp.float32),
            "ln2_b": jnp.zeros((1, N_EMBD), jnp.float32),
            "wq": wq, "wk": wk, "wv": wv, "wo": wo, "bo": bo,
            "w1": w1, "b1": b1, "w2": w2, "b2": b2,
        })

    # Stack per-layer params along a leading [L, ...] axis (and fuse q/k/v columns)
    # so the whole forward runs in one pallas_call. Done once, plain-JAX glue.
    def stack(name):
        return jnp.stack([lp[name] for lp in layers], axis=0)

    params["stacked"] = {
        "ln1_g": stack("ln1_g"), "ln1_b": stack("ln1_b"),
        "wqkv": jnp.stack(
            [jnp.concatenate([lp["wq"], lp["wk"], lp["wv"]], axis=1) for lp in layers],
            axis=0),                                            # (L, C, 3C)
        "wo": stack("wo"), "bo": stack("bo"),
        "ln2_g": stack("ln2_g"), "ln2_b": stack("ln2_b"),
        "w1": stack("w1"), "b1": stack("b1"),
        "w2": stack("w2"), "b2": stack("b2"),
    }
    return params


# ------------------------------- main ----------------------------------------
if __name__ == "__main__":
    key = jax.random.PRNGKey(0)
    pkey, dkey = jax.random.split(key)
    params = init_params(pkey)

    B, T = 2, BLOCK_SIZE
    idx = jax.random.randint(dkey, (B, T), 0, VOCAB_SIZE, dtype=jnp.int32)

    logits = jax.jit(gpt_forward)(params, idx)
    logits = jax.block_until_ready(logits)
    assert logits.shape == (B, T, VOCAB_SIZE)
    assert bool(jnp.all(jnp.isfinite(logits)))
    print("KERNEL_OK")
</pallas_src>

<mosaic_0001>
module attributes {stable_mosaic.version = 11 : i64} {
  func.func @_gpt_kernel(%arg0: i32, %arg1: memref<1x8x32xf32, #tpu.memory_space<vmem>>, %arg2: memref<2x1x32xf32, #tpu.memory_space<vmem>>, %arg3: memref<2x1x32xf32, #tpu.memory_space<vmem>>, %arg4: memref<2x32x96xf32, #tpu.memory_space<vmem>>, %arg5: memref<2x32x32xf32, #tpu.memory_space<vmem>>, %arg6: memref<2x1x32xf32, #tpu.memory_space<vmem>>, %arg7: memref<2x1x32xf32, #tpu.memory_space<vmem>>, %arg8: memref<2x1x32xf32, #tpu.memory_space<vmem>>, %arg9: memref<2x32x128xf32, #tpu.memory_space<vmem>>, %arg10: memref<2x1x128xf32, #tpu.memory_space<vmem>>, %arg11: memref<2x128x32xf32, #tpu.memory_space<vmem>>, %arg12: memref<2x1x32xf32, #tpu.memory_space<vmem>>, %arg13: memref<1x32xf32, #tpu.memory_space<vmem>>, %arg14: memref<1x32xf32, #tpu.memory_space<vmem>>, %arg15: memref<32x128xf32, #tpu.memory_space<vmem>>, %arg16: memref<1x128xf32, #tpu.memory_space<vmem>>, %arg17: memref<1x8x128xf32, #tpu.memory_space<vmem>>) attributes {dimension_semantics = [#tpu.dimension_semantics<parallel>], iteration_bounds = array<i64: 2>, scalar_prefetch = 0 : i64, scratch_operands = 0 : i64, tpu.core_type = #tpu.core_type<tc>, window_params = [{transform_indices = @transform_0, window_bounds = array<i64: 1, 8, 32>}, {pipeline_mode = #tpu.pipeline_mode<synchronous>, transform_indices = @transform_1, window_bounds = array<i64: 2, 1, 32>}, {pipeline_mode = #tpu.pipeline_mode<synchronous>, transform_indices = @transform_2, window_bounds = array<i64: 2, 1, 32>}, {pipeline_mode = #tpu.pipeline_mode<synchronous>, transform_indices = @transform_3, window_bounds = array<i64: 2, 32, 96>}, {pipeline_mode = #tpu.pipeline_mode<synchronous>, transform_indices = @transform_4, window_bounds = array<i64: 2, 32, 32>}, {pipeline_mode = #tpu.pipeline_mode<synchronous>, transform_indices = @transform_5, window_bounds = array<i64: 2, 1, 32>}, {pipeline_mode = #tpu.pipeline_mode<synchronous>, transform_indices = @transform_6, window_bounds = array<i64: 2, 1, 32>}, {pipeline_mode = #tpu.pipeline_mode<synchronous>, transform_indices = @transform_7, window_bounds = array<i64: 2, 1, 32>}, {pipeline_mode = #tpu.pipeline_mode<synchronous>, transform_indices = @transform_8, window_bounds = array<i64: 2, 32, 128>}, {pipeline_mode = #tpu.pipeline_mode<synchronous>, transform_indices = @transform_9, window_bounds = array<i64: 2, 1, 128>}, {pipeline_mode = #tpu.pipeline_mode<synchronous>, transform_indices = @transform_10, window_bounds = array<i64: 2, 128, 32>}, {pipeline_mode = #tpu.pipeline_mode<synchronous>, transform_indices = @transform_11, window_bounds = array<i64: 2, 1, 32>}, {pipeline_mode = #tpu.pipeline_mode<synchronous>, transform_indices = @transform_12, window_bounds = array<i64: 1, 32>}, {pipeline_mode = #tpu.pipeline_mode<synchronous>, transform_indices = @transform_13, window_bounds = array<i64: 1, 32>}, {pipeline_mode = #tpu.pipeline_mode<synchronous>, transform_indices = @transform_14, window_bounds = array<i64: 32, 128>}, {pipeline_mode = #tpu.pipeline_mode<synchronous>, transform_indices = @transform_15, window_bounds = array<i64: 1, 128>}, {transform_indices = @transform_16, window_bounds = array<i64: 1, 8, 128>}]} {
    %c0 = arith.constant 0 : index
    %c0_0 = arith.constant 0 : index
    %c0_1 = arith.constant 0 : index
    %0 = vector.load %arg1[%c0, %c0_0, %c0_1] : memref<1x8x32xf32, #tpu.memory_space<vmem>>, vector<1x8x32xf32>
    %1 = vector.shape_cast %0 : vector<1x8x32xf32> to vector<8x32xf32>
    %2 = tpu.iota {dimensions = array<i32: 0>} : vector<8x8xi32>
    %3 = tpu.iota {dimensions = array<i32: 1>} : vector<8x8xi32>
    %4 = arith.cmpi sle, %3, %2 : vector<8x8xi32>
    %cst = arith.constant 0.000000e+00 : f32
    %cst_2 = arith.constant -1.000000e+30 : f32
    %5 = vector.broadcast %cst : f32 to vector<8x8xf32>
    %6 = vector.broadcast %cst_2 : f32 to vector<8x8xf32>
    %7 = arith.select %4, %5, %6 : vector<8x8xi1>, vector<8x8xf32>
    %c0_3 = arith.constant 0 : index
    %c0_4 = arith.constant 0 : index
    %c0_5 = arith.constant 0 : index
    %8 = vector.load %arg2[%c0_3, %c0_4, %c0_5] : memref<2x1x32xf32, #tpu.memory_space<vmem>>, vector<1x1x32xf32>
    %9 = vector.shape_cast %8 : vector<1x1x32xf32> to vector<1x32xf32>
    %c0_6 = arith.constant 0 : index
    %c0_7 = arith.constant 0 : index
    %c0_8 = arith.constant 0 : index
    %10 = vector.load %arg3[%c0_6, %c0_7, %c0_8] : memref<2x1x32xf32, #tpu.memory_space<vmem>>, vector<1x1x32xf32>
    %11 = vector.shape_cast %10 : vector<1x1x32xf32> to vector<1x32xf32>
    %cst_9 = arith.constant dense<0.000000e+00> : vector<8xf32>
    %12 = vector.multi_reduction <add>, %1, %cst_9 [1] : vector<8x32xf32> to vector<8xf32>
    %13 = vector.shape_cast %12 : vector<8xf32> to vector<8x1xf32>
    %cst_10 = arith.constant 3.200000e+01 : f32
    %14 = vector.broadcast %cst_10 : f32 to vector<8x1xf32>
    %15 = arith.divf %13, %14 : vector<8x1xf32>
    %16 = vector.broadcast %15 : vector<8x1xf32> to vector<8x32xf32>
    %17 = arith.subf %1, %16 : vector<8x32xf32>
    %18 = arith.mulf %17, %17 : vector<8x32xf32>
    %cst_11 = arith.constant dense<0.000000e+00> : vector<8xf32>
    %19 = vector.multi_reduction <add>, %18, %cst_11 [1] : vector<8x32xf32> to vector<8xf32>
    %20 = vector.shape_cast %19 : vector<8xf32> to vector<8x1xf32>
    %cst_12 = arith.constant 3.200000e+01 : f32
    %21 = vector.broadcast %cst_12 : f32 to vector<8x1xf32>
    %22 = arith.divf %20, %21 : vector<8x1xf32>
    %23 = vector.broadcast %15 : vector<8x1xf32> to vector<8x32xf32>
    %24 = arith.subf %1, %23 : vector<8x32xf32>
    %cst_13 = arith.constant 9.99999974E-6 : f32
    %25 = vector.broadcast %cst_13 : f32 to vector<8x1xf32>
    %26 = arith.addf %22, %25 : vector<8x1xf32>
    %27 = math.rsqrt %26 : vector<8x1xf32>
    %28 = vector.broadcast %27 : vector<8x1xf32> to vector<8x32xf32>
    %29 = arith.mulf %24, %28 : vector<8x32xf32>
    %30 = vector.broadcast %9 : vector<1x32xf32> to vector<8x32xf32>
    %31 = arith.mulf %29, %30 : vector<8x32xf32>
    %32 = vector.broadcast %11 : vector<1x32xf32> to vector<8x32xf32>
    %33 = arith.addf %31, %32 : vector<8x32xf32>
    %c0_14 = arith.constant 0 : index
    %c0_15 = arith.constant 0 : index
    %c0_16 = arith.constant 0 : index
    %34 = vector.load %arg4[%c0_14, %c0_15, %c0_16] : memref<2x32x96xf32, #tpu.memory_space<vmem>>, vector<1x32x96xf32>
    %35 = vector.shape_cast %34 : vector<1x32x96xf32> to vector<32x96xf32>
    %cst_17 = arith.constant dense<0.000000e+00> : vector<8x96xf32>
    %36 = tpu.matmul %33, %35, %cst_17 {dimension_numbers = #tpu.dot_dimension_numbers<[1], [0], [0], [1], [0, 0, 1, 1], [], []>} : vector<8x32xf32>, vector<32x96xf32>, vector<8x96xf32> -> vector<8x96xf32>
    %37 = vector.extract_strided_slice %36 {offsets = [0, 0], sizes = [8, 8], strides = [1, 1]} : vector<8x96xf32> to vector<8x8xf32>
    %38 = vector.extract_strided_slice %36 {offsets = [0, 32], sizes = [8, 8], strides = [1, 1]} : vector<8x96xf32> to vector<8x8xf32>
    %39 = vector.extract_strided_slice %36 {offsets = [0, 64], sizes = [8, 8], strides = [1, 1]} : vector<8x96xf32> to vector<8x8xf32>
    %40 = tpu.transpose %38, [1, 0] : vector<8x8xf32> -> vector<8x8xf32>
    %cst_18 = arith.constant dense<0.000000e+00> : vector<8x8xf32>
    %41 = tpu.matmul %37, %40, %cst_18 {dimension_numbers = #tpu.dot_dimension_numbers<[1], [0], [0], [1], [0, 0, 1, 1], [], []>} : vector<8x8xf32>, vector<8x8xf32>, vector<8x8xf32> -> vector<8x8xf32>
    %cst_19 = arith.constant 0.176776692 : f32
    %42 = vector.broadcast %cst_19 : f32 to vector<8x8xf32>
    %43 = arith.mulf %41, %42 : vector<8x8xf32>
    %44 = arith.addf %43, %7 : vector<8x8xf32>
    %cst_20 = arith.constant dense<0xFF800000> : vector<8xf32>
    %45 = vector.multi_reduction <maximumf>, %44, %cst_20 [1] : vector<8x8xf32> to vector<8xf32>
    %46 = vector.shape_cast %45 : vector<8xf32> to vector<8x1xf32>
    %47 = vector.broadcast %46 : vector<8x1xf32> to vector<8x8xf32>
    %48 = arith.subf %44, %47 : vector<8x8xf32>
    %49 = math.exp %48 : vector<8x8xf32>
    %cst_21 = arith.constant dense<0.000000e+00> : vector<8xf32>
    %50 = vector.multi_reduction <add>, %49, %cst_21 [1] : vector<8x8xf32> to vector<8xf32>
    %51 = vector.shape_cast %50 : vector<8xf32> to vector<8x1xf32>
    %52 = tpu.reciprocal %51 {approx = true} : vector<8x1xf32> -> vector<8x1xf32>
    %53 = vector.broadcast %52 : vector<8x1xf32> to vector<8x8xf32>
    %54 = arith.mulf %49, %53 : vector<8x8xf32>
    %cst_22 = arith.constant dense<0.000000e+00> : vector<8x8xf32>
    %55 = tpu.matmul %54, %39, %cst_22 {dimension_numbers = #tpu.dot_dimension_numbers<[1], [0], [0], [1], [0, 0, 1, 1], [], []>} : vector<8x8xf32>, vector<8x8xf32>, vector<8x8xf32> -> vector<8x8xf32>
    %56 = vector.extract_strided_slice %36 {offsets = [0, 8], sizes = [8, 8], strides = [1, 1]} : vector<8x96xf32> to vector<8x8xf32>
    %57 = vector.extract_strided_slice %36 {offsets = [0, 40], sizes = [8, 8], strides = [1, 1]} : vector<8x96xf32> to vector<8x8xf32>
    %58 = vector.extract_strided_slice %36 {offsets = [0, 72], sizes = [8, 8], strides = [1, 1]} : vector<8x96xf32> to vector<8x8xf32>
    %59 = tpu.transpose %57, [1, 0] : vector<8x8xf32> -> vector<8x8xf32>
    %cst_23 = arith.constant dense<0.000000e+00> : vector<8x8xf32>
    %60 = tpu.matmul %56, %59, %cst_23 {dimension_numbers = #tpu.dot_dimension_numbers<[1], [0], [0], [1], [0, 0, 1, 1], [], []>} : vector<8x8xf32>, vector<8x8xf32>, vector<8x8xf32> -> vector<8x8xf32>
    %cst_24 = arith.constant 0.176776692 : f32
    %61 = vector.broadcast %cst_24 : f32 to vector<8x8xf32>
    %62 = arith.mulf %60, %61 : vector<8x8xf32>
    %63 = arith.addf %62, %7 : vector<8x8xf32>
    %cst_25 = arith.constant dense<0xFF800000> : vector<8xf32>
    %64 = vector.multi_reduction <maximumf>, %63, %cst_25 [1] : vector<8x8xf32> to vector<8xf32>
    %65 = vector.shape_cast %64 : vector<8xf32> to vector<8x1xf32>
    %66 = vector.broadcast %65 : vector<8x1xf32> to vector<8x8xf32>
    %67 = arith.subf %63, %66 : vector<8x8xf32>
    %68 = math.exp %67 : vector<8x8xf32>
    %cst_26 = arith.constant dense<0.000000e+00> : vector<8xf32>
    %69 = vector.multi_reduction <add>, %68, %cst_26 [1] : vector<8x8xf32> to vector<8xf32>
    %70 = vector.shape_cast %69 : vector<8xf32> to vector<8x1xf32>
    %71 = tpu.reciprocal %70 {approx = true} : vector<8x1xf32> -> vector<8x1xf32>
    %72 = vector.broadcast %71 : vector<8x1xf32> to vector<8x8xf32>
    %73 = arith.mulf %68, %72 : vector<8x8xf32>
    %cst_27 = arith.constant dense<0.000000e+00> : vector<8x8xf32>
    %74 = tpu.matmul %73, %58, %cst_27 {dimension_numbers = #tpu.dot_dimension_numbers<[1], [0], [0], [1], [0, 0, 1, 1], [], []>} : vector<8x8xf32>, vector<8x8xf32>, vector<8x8xf32> -> vector<8x8xf32>
    %75 = vector.extract_strided_slice %36 {offsets = [0, 16], sizes = [8, 8], strides = [1, 1]} : vector<8x96xf32> to vector<8x8xf32>
    %76 = vector.extract_strided_slice %36 {offsets = [0, 48], sizes = [8, 8], strides = [1, 1]} : vector<8x96xf32> to vector<8x8xf32>
    %77 = vector.extract_strided_slice %36 {offsets = [0, 80], sizes = [8, 8], strides = [1, 1]} : vector<8x96xf32> to vector<8x8xf32>
    %78 = tpu.transpose %76, [1, 0] : vector<8x8xf32> -> vector<8x8xf32>
    %cst_28 = arith.constant dense<0.000000e+00> : vector<8x8xf32>
    %79 = tpu.matmul %75, %78, %cst_28 {dimension_numbers = #tpu.dot_dimension_numbers<[1], [0], [0], [1], [0, 0, 1, 1], [], []>} : vector<8x8xf32>, vector<8x8xf32>, vector<8x8xf32> -> vector<8x8xf32>
    %cst_29 = arith.constant 0.176776692 : f32
    %80 = vector.broadcast %cst_29 : f32 to vector<8x8xf32>
    %81 = arith.mulf %79, %80 : vector<8x8xf32>
    %82 = arith.addf %81, %7 : vector<8x8xf32>
    %cst_30 = arith.constant dense<0xFF800000> : vector<8xf32>
    %83 = vector.multi_reduction <maximumf>, %82, %cst_30 [1] : vector<8x8xf32> to vector<8xf32>
    %84 = vector.shape_cast %83 : vector<8xf32> to vector<8x1xf32>
    %85 = vector.broadcast %84 : vector<8x1xf32> to vector<8x8xf32>
    %86 = arith.subf %82, %85 : vector<8x8xf32>
    %87 = math.exp %86 : vector<8x8xf32>
    %cst_31 = arith.constant dense<0.000000e+00> : vector<8xf32>
    %88 = vector.multi_reduction <add>, %87, %cst_31 [1] : vector<8x8xf32> to vector<8xf32>
    %89 = vector.shape_cast %88 : vector<8xf32> to vector<8x1xf32>
    %90 = tpu.reciprocal %89 {approx = true} : vector<8x1xf32> -> vector<8x1xf32>
    %91 = vector.broadcast %90 : vector<8x1xf32> to vector<8x8xf32>
    %92 = arith.mulf %87, %91 : vector<8x8xf32>
    %cst_32 = arith.constant dense<0.000000e+00> : vector<8x8xf32>
    %93 = tpu.matmul %92, %77, %cst_32 {dimension_numbers = #tpu.dot_dimension_numbers<[1], [0], [0], [1], [0, 0, 1, 1], [], []>} : vector<8x8xf32>, vector<8x8xf32>, vector<8x8xf32> -> vector<8x8xf32>
    %94 = vector.extract_strided_slice %36 {offsets = [0, 24], sizes = [8, 8], strides = [1, 1]} : vector<8x96xf32> to vector<8x8xf32>
    %95 = vector.extract_strided_slice %36 {offsets = [0, 56], sizes = [8, 8], strides = [1, 1]} : vector<8x96xf32> to vector<8x8xf32>
    %96 = vector.extract_strided_slice %36 {offsets = [0, 88], sizes = [8, 8], strides = [1, 1]} : vector<8x96xf32> to vector<8x8xf32>
    %97 = tpu.transpose %95, [1, 0] : vector<8x8xf32> -> vector<8x8xf32>
    %cst_33 = arith.constant dense<0.000000e+00> : vector<8x8xf32>
    %98 = tpu.matmul %94, %97, %cst_33 {dimension_numbers = #tpu.dot_dimension_numbers<[1], [0], [0], [1], [0, 0, 1, 1], [], []>} : vector<8x8xf32>, vector<8x8xf32>, vector<8x8xf32> -> vector<8x8xf32>
    %cst_34 = arith.constant 0.176776692 : f32
    %99 = vector.broadcast %cst_34 : f32 to vector<8x8xf32>
    %100 = arith.mulf %98, %99 : vector<8x8xf32>
    %101 = arith.addf %100, %7 : vector<8x8xf32>
    %cst_35 = arith.constant dense<0xFF800000> : vector<8xf32>
    %102 = vector.multi_reduction <maximumf>, %101, %cst_35 [1] : vector<8x8xf32> to vector<8xf32>
    %103 = vector.shape_cast %102 : vector<8xf32> to vector<8x1xf32>
    %104 = vector.broadcast %103 : vector<8x1xf32> to vector<8x8xf32>
    %105 = arith.subf %101, %104 : vector<8x8xf32>
    %106 = math.exp %105 : vector<8x8xf32>
    %cst_36 = arith.constant dense<0.000000e+00> : vector<8xf32>
    %107 = vector.multi_reduction <add>, %106, %cst_36 [1] : vector<8x8xf32> to vector<8xf32>
    %108 = vector.shape_cast %107 : vector<8xf32> to vector<8x1xf32>
    %109 = tpu.reciprocal %108 {approx = true} : vector<8x1xf32> -> vector<8x1xf32>
    %110 = vector.broadcast %109 : vector<8x1xf32> to vector<8x8xf32>
    %111 = arith.mulf %106, %110 : vector<8x8xf32>
    %cst_37 = arith.constant dense<0.000000e+00> : vector<8x8xf32>
    %112 = tpu.matmul %111, %96, %cst_37 {dimension_numbers = #tpu.dot_dimension_numbers<[1], [0], [0], [1], [0, 0, 1, 1], [], []>} : vector<8x8xf32>, vector<8x8xf32>, vector<8x8xf32> -> vector<8x8xf32>
    %113 = tpu.concatenate %55, %74, %93, %112 in 1 : vector<8x8xf32>, vector<8x8xf32>, vector<8x8xf32>, vector<8x8xf32> -> vector<8x32xf32>
    %c0_38 = arith.constant 0 : index
    %c0_39 = arith.constant 0 : index
    %c0_40 = arith.constant 0 : index
    %114 = vector.load %arg5[%c0_38, %c0_39, %c0_40] : memref<2x32x32xf32, #tpu.memory_space<vmem>>, vector<1x32x32xf32>
    %115 = vector.shape_cast %114 : vector<1x32x32xf32> to vector<32x32xf32>
    %cst_41 = arith.constant dense<0.000000e+00> : vector<8x32xf32>
    %116 = tpu.matmul %113, %115, %cst_41 {dimension_numbers = #tpu.dot_dimension_numbers<[1], [0], [0], [1], [0, 0, 1, 1], [], []>} : vector<8x32xf32>, vector<32x32xf32>, vector<8x32xf32> -> vector<8x32xf32>
    %c0_42 = arith.constant 0 : index
    %c0_43 = arith.constant 0 : index
    %c0_44 = arith.constant 0 : index
    %117 = vector.load %arg6[%c0_42, %c0_43, %c0_44] : memref<2x1x32xf32, #tpu.memory_space<vmem>>, vector<1x1x32xf32>
    %118 = vector.shape_cast %117 : vector<1x1x32xf32> to vector<1x32xf32>
    %119 = vector.broadcast %118 : vector<1x32xf32> to vector<8x32xf32>
    %120 = arith.addf %116, %119 : vector<8x32xf32>
    %121 = arith.addf %1, %120 : vector<8x32xf32>
    %c0_45 = arith.constant 0 : index
    %c0_46 = arith.constant 0 : index
    %c0_47 = arith.constant 0 : index
    %122 = vector.load %arg7[%c0_45, %c0_46, %c0_47] : memref<2x1x32xf32, #tpu.memory_space<vmem>>, vector<1x1x32xf32>
    %123 = vector.shape_cast %122 : vector<1x1x32xf32> to vector<1x32xf32>
    %c0_48 = arith.constant 0 : index
    %c0_49 = arith.constant 0 : index
    %c0_50 = arith.constant 0 : index
    %124 = vector.load %arg8[%c0_48, %c0_49, %c0_50] : memref<2x1x32xf32, #tpu.memory_space<vmem>>, vector<1x1x32xf32>
    %125 = vector.shape_cast %124 : vector<1x1x32xf32> to vector<1x32xf32>
    %cst_51 = arith.constant dense<0.000000e+00> : vector<8xf32>
    %126 = vector.multi_reduction <add>, %121, %cst_51 [1] : vector<8x32xf32> to vector<8xf32>
    %127 = vector.shape_cast %126 : vector<8xf32> to vector<8x1xf32>
    %cst_52 = arith.constant 3.200000e+01 : f32
    %128 = vector.broadcast %cst_52 : f32 to vector<8x1xf32>
    %129 = arith.divf %127, %128 : vector<8x1xf32>
    %130 = vector.broadcast %129 : vector<8x1xf32> to vector<8x32xf32>
    %131 = arith.subf %121, %130 : vector<8x32xf32>
    %132 = arith.mulf %131, %131 : vector<8x32xf32>
    %cst_53 = arith.constant dense<0.000000e+00> : vector<8xf32>
    %133 = vector.multi_reduction <add>, %132, %cst_53 [1] : vector<8x32xf32> to vector<8xf32>
    %134 = vector.shape_cast %133 : vector<8xf32> to vector<8x1xf32>
    %cst_54 = arith.constant 3.200000e+01 : f32
    %135 = vector.broadcast %cst_54 : f32 to vector<8x1xf32>
    %136 = arith.divf %134, %135 : vector<8x1xf32>
    %137 = vector.broadcast %129 : vector<8x1xf32> to vector<8x32xf32>
    %138 = arith.subf %121, %137 : vector<8x32xf32>
    %cst_55 = arith.constant 9.99999974E-6 : f32
    %139 = vector.broadcast %cst_55 : f32 to vector<8x1xf32>
    %140 = arith.addf %136, %139 : vector<8x1xf32>
    %141 = math.rsqrt %140 : vector<8x1xf32>
    %142 = vector.broadcast %141 : vector<8x1xf32> to vector<8x32xf32>
    %143 = arith.mulf %138, %142 : vector<8x32xf32>
    %144 = vector.broadcast %123 : vector<1x32xf32> to vector<8x32xf32>
    %145 = arith.mulf %143, %144 : vector<8x32xf32>
    %146 = vector.broadcast %125 : vector<1x32xf32> to vector<8x32xf32>
    %147 = arith.addf %145, %146 : vector<8x32xf32>
    %c0_56 = arith.constant 0 : index
    %c0_57 = arith.constant 0 : index
    %c0_58 = arith.constant 0 : index
    %148 = vector.load %arg9[%c0_56, %c0_57, %c0_58] : memref<2x32x128xf32, #tpu.memory_space<vmem>>, vector<1x32x128xf32>
    %149 = vector.shape_cast %148 : vector<1x32x128xf32> to vector<32x128xf32>
    %cst_59 = arith.constant dense<0.000000e+00> : vector<8x128xf32>
    %150 = tpu.matmul %147, %149, %cst_59 {dimension_numbers = #tpu.dot_dimension_numbers<[1], [0], [0], [1], [0, 0, 1, 1], [], []>} : vector<8x32xf32>, vector<32x128xf32>, vector<8x128xf32> -> vector<8x128xf32>
    %c0_60 = arith.constant 0 : index
    %c0_61 = arith.constant 0 : index
    %c0_62 = arith.constant 0 : index
    %151 = vector.load %arg10[%c0_60, %c0_61, %c0_62] : memref<2x1x128xf32, #tpu.memory_space<vmem>>, vector<1x1x128xf32>
    %152 = vector.shape_cast %151 : vector<1x1x128xf32> to vector<1x128xf32>
    %153 = vector.broadcast %152 : vector<1x128xf32> to vector<8x128xf32>
    %154 = arith.addf %150, %153 : vector<8x128xf32>
    %cst_63 = arith.constant 0.000000e+00 : f32
    %155 = vector.broadcast %cst_63 : f32 to vector<8x128xf32>
    %156 = arith.maximumf %154, %155 : vector<8x128xf32>
    %c0_64 = arith.constant 0 : index
    %c0_65 = arith.constant 0 : index
    %c0_66 = arith.constant 0 : index
    %157 = vector.load %arg11[%c0_64, %c0_65, %c0_66] : memref<2x128x32xf32, #tpu.memory_space<vmem>>, vector<1x128x32xf32>
    %158 = vector.shape_cast %157 : vector<1x128x32xf32> to vector<128x32xf32>
    %cst_67 = arith.constant dense<0.000000e+00> : vector<8x32xf32>
    %159 = tpu.matmul %156, %158, %cst_67 {dimension_numbers = #tpu.dot_dimension_numbers<[1], [0], [0], [1], [0, 0, 1, 1], [], []>} : vector<8x128xf32>, vector<128x32xf32>, vector<8x32xf32> -> vector<8x32xf32>
    %c0_68 = arith.constant 0 : index
    %c0_69 = arith.constant 0 : index
    %c0_70 = arith.constant 0 : index
    %160 = vector.load %arg12[%c0_68, %c0_69, %c0_70] : memref<2x1x32xf32, #tpu.memory_space<vmem>>, vector<1x1x32xf32>
    %161 = vector.shape_cast %160 : vector<1x1x32xf32> to vector<1x32xf32>
    %162 = vector.broadcast %161 : vector<1x32xf32> to vector<8x32xf32>
    %163 = arith.addf %159, %162 : vector<8x32xf32>
    %164 = arith.addf %121, %163 : vector<8x32xf32>
    %c1 = arith.constant 1 : index
    %c0_71 = arith.constant 0 : index
    %c0_72 = arith.constant 0 : index
    %165 = vector.load %arg2[%c1, %c0_71, %c0_72] : memref<2x1x32xf32, #tpu.memory_space<vmem>>, vector<1x1x32xf32>
    %166 = vector.shape_cast %165 : vector<1x1x32xf32> to vector<1x32xf32>
    %c1_73 = arith.constant 1 : index
    %c0_74 = arith.constant 0 : index
    %c0_75 = arith.constant 0 : index
    %167 = vector.load %arg3[%c1_73, %c0_74, %c0_75] : memref<2x1x32xf32, #tpu.memory_space<vmem>>, vector<1x1x32xf32>
    %168 = vector.shape_cast %167 : vector<1x1x32xf32> to vector<1x32xf32>
    %cst_76 = arith.constant dense<0.000000e+00> : vector<8xf32>
    %169 = vector.multi_reduction <add>, %164, %cst_76 [1] : vector<8x32xf32> to vector<8xf32>
    %170 = vector.shape_cast %169 : vector<8xf32> to vector<8x1xf32>
    %cst_77 = arith.constant 3.200000e+01 : f32
    %171 = vector.broadcast %cst_77 : f32 to vector<8x1xf32>
    %172 = arith.divf %170, %171 : vector<8x1xf32>
    %173 = vector.broadcast %172 : vector<8x1xf32> to vector<8x32xf32>
    %174 = arith.subf %164, %173 : vector<8x32xf32>
    %175 = arith.mulf %174, %174 : vector<8x32xf32>
    %cst_78 = arith.constant dense<0.000000e+00> : vector<8xf32>
    %176 = vector.multi_reduction <add>, %175, %cst_78 [1] : vector<8x32xf32> to vector<8xf32>
    %177 = vector.shape_cast %176 : vector<8xf32> to vector<8x1xf32>
    %cst_79 = arith.constant 3.200000e+01 : f32
    %178 = vector.broadcast %cst_79 : f32 to vector<8x1xf32>
    %179 = arith.divf %177, %178 : vector<8x1xf32>
    %180 = vector.broadcast %172 : vector<8x1xf32> to vector<8x32xf32>
    %181 = arith.subf %164, %180 : vector<8x32xf32>
    %cst_80 = arith.constant 9.99999974E-6 : f32
    %182 = vector.broadcast %cst_80 : f32 to vector<8x1xf32>
    %183 = arith.addf %179, %182 : vector<8x1xf32>
    %184 = math.rsqrt %183 : vector<8x1xf32>
    %185 = vector.broadcast %184 : vector<8x1xf32> to vector<8x32xf32>
    %186 = arith.mulf %181, %185 : vector<8x32xf32>
    %187 = vector.broadcast %166 : vector<1x32xf32> to vector<8x32xf32>
    %188 = arith.mulf %186, %187 : vector<8x32xf32>
    %189 = vector.broadcast %168 : vector<1x32xf32> to vector<8x32xf32>
    %190 = arith.addf %188, %189 : vector<8x32xf32>
    %c1_81 = arith.constant 1 : index
    %c0_82 = arith.constant 0 : index
    %c0_83 = arith.constant 0 : index
    %191 = vector.load %arg4[%c1_81, %c0_82, %c0_83] : memref<2x32x96xf32, #tpu.memory_space<vmem>>, vector<1x32x96xf32>
    %192 = vector.shape_cast %191 : vector<1x32x96xf32> to vector<32x96xf32>
    %cst_84 = arith.constant dense<0.000000e+00> : vector<8x96xf32>
    %193 = tpu.matmul %190, %192, %cst_84 {dimension_numbers = #tpu.dot_dimension_numbers<[1], [0], [0], [1], [0, 0, 1, 1], [], []>} : vector<8x32xf32>, vector<32x96xf32>, vector<8x96xf32> -> vector<8x96xf32>
    %194 = vector.extract_strided_slice %193 {offsets = [0, 0], sizes = [8, 8], strides = [1, 1]} : vector<8x96xf32> to vector<8x8xf32>
    %195 = vector.extract_strided_slice %193 {offsets = [0, 32], sizes = [8, 8], strides = [1, 1]} : vector<8x96xf32> to vector<8x8xf32>
    %196 = vector.extract_strided_slice %193 {offsets = [0, 64], sizes = [8, 8], strides = [1, 1]} : vector<8x96xf32> to vector<8x8xf32>
    %197 = tpu.transpose %195, [1, 0] : vector<8x8xf32> -> vector<8x8xf32>
    %cst_85 = arith.constant dense<0.000000e+00> : vector<8x8xf32>
    %198 = tpu.matmul %194, %197, %cst_85 {dimension_numbers = #tpu.dot_dimension_numbers<[1], [0], [0], [1], [0, 0, 1, 1], [], []>} : vector<8x8xf32>, vector<8x8xf32>, vector<8x8xf32> -> vector<8x8xf32>
    %cst_86 = arith.constant 0.176776692 : f32
    %199 = vector.broadcast %cst_86 : f32 to vector<8x8xf32>
    %200 = arith.mulf %198, %199 : vector<8x8xf32>
    %201 = arith.addf %200, %7 : vector<8x8xf32>
    %cst_87 = arith.constant dense<0xFF800000> : vector<8xf32>
    %202 = vector.multi_reduction <maximumf>, %201, %cst_87 [1] : vector<8x8xf32> to vector<8xf32>
    %203 = vector.shape_cast %202 : vector<8xf32> to vector<8x1xf32>
    %204 = vector.broadcast %203 : vector<8x1xf32> to vector<8x8xf32>
    %205 = arith.subf %201, %204 : vector<8x8xf32>
    %206 = math.exp %205 : vector<8x8xf32>
    %cst_88 = arith.constant dense<0.000000e+00> : vector<8xf32>
    %207 = vector.multi_reduction <add>, %206, %cst_88 [1] : vector<8x8xf32> to vector<8xf32>
    %208 = vector.shape_cast %207 : vector<8xf32> to vector<8x1xf32>
    %209 = tpu.reciprocal %208 {approx = true} : vector<8x1xf32> -> vector<8x1xf32>
    %210 = vector.broadcast %209 : vector<8x1xf32> to vector<8x8xf32>
    %211 = arith.mulf %206, %210 : vector<8x8xf32>
    %cst_89 = arith.constant dense<0.000000e+00> : vector<8x8xf32>
    %212 = tpu.matmul %211, %196, %cst_89 {dimension_numbers = #tpu.dot_dimension_numbers<[1], [0], [0], [1], [0, 0, 1, 1], [], []>} : vector<8x8xf32>, vector<8x8xf32>, vector<8x8xf32> -> vector<8x8xf32>
    %213 = vector.extract_strided_slice %193 {offsets = [0, 8], sizes = [8, 8], strides = [1, 1]} : vector<8x96xf32> to vector<8x8xf32>
    %214 = vector.extract_strided_slice %193 {offsets = [0, 40], sizes = [8, 8], strides = [1, 1]} : vector<8x96xf32> to vector<8x8xf32>
    %215 = vector.extract_strided_slice %193 {offsets = [0, 72], sizes = [8, 8], strides = [1, 1]} : vector<8x96xf32> to vector<8x8xf32>
    %216 = tpu.transpose %214, [1, 0] : vector<8x8xf32> -> vector<8x8xf32>
    %cst_90 = arith.constant dense<0.000000e+00> : vector<8x8xf32>
    %217 = tpu.matmul %213, %216, %cst_90 {dimension_numbers = #tpu.dot_dimension_numbers<[1], [0], [0], [1], [0, 0, 1, 1], [], []>} : vector<8x8xf32>, vector<8x8xf32>, vector<8x8xf32> -> vector<8x8xf32>
    %cst_91 = arith.constant 0.176776692 : f32
    %218 = vector.broadcast %cst_91 : f32 to vector<8x8xf32>
    %219 = arith.mulf %217, %218 : vector<8x8xf32>
    %220 = arith.addf %219, %7 : vector<8x8xf32>
    %cst_92 = arith.constant dense<0xFF800000> : vector<8xf32>
    %221 = vector.multi_reduction <maximumf>, %220, %cst_92 [1] : vector<8x8xf32> to vector<8xf32>
    %222 = vector.shape_cast %221 : vector<8xf32> to vector<8x1xf32>
    %223 = vector.broadcast %222 : vector<8x1xf32> to vector<8x8xf32>
    %224 = arith.subf %220, %223 : vector<8x8xf32>
    %225 = math.exp %224 : vector<8x8xf32>
    %cst_93 = arith.constant dense<0.000000e+00> : vector<8xf32>
    %226 = vector.multi_reduction <add>, %225, %cst_93 [1] : vector<8x8xf32> to vector<8xf32>
    %227 = vector.shape_cast %226 : vector<8xf32> to vector<8x1xf32>
    %228 = tpu.reciprocal %227 {approx = true} : vector<8x1xf32> -> vector<8x1xf32>
    %229 = vector.broadcast %228 : vector<8x1xf32> to vector<8x8xf32>
    %230 = arith.mulf %225, %229 : vector<8x8xf32>
    %cst_94 = arith.constant dense<0.000000e+00> : vector<8x8xf32>
    %231 = tpu.matmul %230, %215, %cst_94 {dimension_numbers = #tpu.dot_dimension_numbers<[1], [0], [0], [1], [0, 0, 1, 1], [], []>} : vector<8x8xf32>, vector<8x8xf32>, vector<8x8xf32> -> vector<8x8xf32>
    %232 = vector.extract_strided_slice %193 {offsets = [0, 16], sizes = [8, 8], strides = [1, 1]} : vector<8x96xf32> to vector<8x8xf32>
    %233 = vector.extract_strided_slice %193 {offsets = [0, 48], sizes = [8, 8], strides = [1, 1]} : vector<8x96xf32> to vector<8x8xf32>
    %234 = vector.extract_strided_slice %193 {offsets = [0, 80], sizes = [8, 8], strides = [1, 1]} : vector<8x96xf32> to vector<8x8xf32>
    %235 = tpu.transpose %233, [1, 0] : vector<8x8xf32> -> vector<8x8xf32>
    %cst_95 = arith.constant dense<0.000000e+00> : vector<8x8xf32>
    %236 = tpu.matmul %232, %235, %cst_95 {dimension_numbers = #tpu.dot_dimension_numbers<[1], [0], [0], [1], [0, 0, 1, 1], [], []>} : vector<8x8xf32>, vector<8x8xf32>, vector<8x8xf32> -> vector<8x8xf32>
    %cst_96 = arith.constant 0.176776692 : f32
    %237 = vector.broadcast %cst_96 : f32 to vector<8x8xf32>
    %238 = arith.mulf %236, %237 : vector<8x8xf32>
    %239 = arith.addf %238, %7 : vector<8x8xf32>
    %cst_97 = arith.constant dense<0xFF800000> : vector<8xf32>
    %240 = vector.multi_reduction <maximumf>, %239, %cst_97 [1] : vector<8x8xf32> to vector<8xf32>
    %241 = vector.shape_cast %240 : vector<8xf32> to vector<8x1xf32>
    %242 = vector.broadcast %241 : vector<8x1xf32> to vector<8x8xf32>
    %243 = arith.subf %239, %242 : vector<8x8xf32>
    %244 = math.exp %243 : vector<8x8xf32>
    %cst_98 = arith.constant dense<0.000000e+00> : vector<8xf32>
    %245 = vector.multi_reduction <add>, %244, %cst_98 [1] : vector<8x8xf32> to vector<8xf32>
    %246 = vector.shape_cast %245 : vector<8xf32> to vector<8x1xf32>
    %247 = tpu.reciprocal %246 {approx = true} : vector<8x1xf32> -> vector<8x1xf32>
    %248 = vector.broadcast %247 : vector<8x1xf32> to vector<8x8xf32>
    %249 = arith.mulf %244, %248 : vector<8x8xf32>
    %cst_99 = arith.constant dense<0.000000e+00> : vector<8x8xf32>
    %250 = tpu.matmul %249, %234, %cst_99 {dimension_numbers = #tpu.dot_dimension_numbers<[1], [0], [0], [1], [0, 0, 1, 1], [], []>} : vector<8x8xf32>, vector<8x8xf32>, vector<8x8xf32> -> vector<8x8xf32>
    %251 = vector.extract_strided_slice %193 {offsets = [0, 24], sizes = [8, 8], strides = [1, 1]} : vector<8x96xf32> to vector<8x8xf32>
    %252 = vector.extract_strided_slice %193 {offsets = [0, 56], sizes = [8, 8], strides = [1, 1]} : vector<8x96xf32> to vector<8x8xf32>
    %253 = vector.extract_strided_slice %193 {offsets = [0, 88], sizes = [8, 8], strides = [1, 1]} : vector<8x96xf32> to vector<8x8xf32>
    %254 = tpu.transpose %252, [1, 0] : vector<8x8xf32> -> vector<8x8xf32>
    %cst_100 = arith.constant dense<0.000000e+00> : vector<8x8xf32>
    %255 = tpu.matmul %251, %254, %cst_100 {dimension_numbers = #tpu.dot_dimension_numbers<[1], [0], [0], [1], [0, 0, 1, 1], [], []>} : vector<8x8xf32>, vector<8x8xf32>, vector<8x8xf32> -> vector<8x8xf32>
    %cst_101 = arith.constant 0.176776692 : f32
    %256 = vector.broadcast %cst_101 : f32 to vector<8x8xf32>
    %257 = arith.mulf %255, %256 : vector<8x8xf32>
    %258 = arith.addf %257, %7 : vector<8x8xf32>
    %cst_102 = arith.constant dense<0xFF800000> : vector<8xf32>
    %259 = vector.multi_reduction <maximumf>, %258, %cst_102 [1] : vector<8x8xf32> to vector<8xf32>
    %260 = vector.shape_cast %259 : vector<8xf32> to vector<8x1xf32>
    %261 = vector.broadcast %260 : vector<8x1xf32> to vector<8x8xf32>
    %262 = arith.subf %258, %261 : vector<8x8xf32>
    %263 = math.exp %262 : vector<8x8xf32>
    %cst_103 = arith.constant dense<0.000000e+00> : vector<8xf32>
    %264 = vector.multi_reduction <add>, %263, %cst_103 [1] : vector<8x8xf32> to vector<8xf32>
    %265 = vector.shape_cast %264 : vector<8xf32> to vector<8x1xf32>
    %266 = tpu.reciprocal %265 {approx = true} : vector<8x1xf32> -> vector<8x1xf32>
    %267 = vector.broadcast %266 : vector<8x1xf32> to vector<8x8xf32>
    %268 = arith.mulf %263, %267 : vector<8x8xf32>
    %cst_104 = arith.constant dense<0.000000e+00> : vector<8x8xf32>
    %269 = tpu.matmul %268, %253, %cst_104 {dimension_numbers = #tpu.dot_dimension_numbers<[1], [0], [0], [1], [0, 0, 1, 1], [], []>} : vector<8x8xf32>, vector<8x8xf32>, vector<8x8xf32> -> vector<8x8xf32>
    %270 = tpu.concatenate %212, %231, %250, %269 in 1 : vector<8x8xf32>, vector<8x8xf32>, vector<8x8xf32>, vector<8x8xf32> -> vector<8x32xf32>
    %c1_105 = arith.constant 1 : index
    %c0_106 = arith.constant 0 : index
    %c0_107 = arith.constant 0 : index
    %271 = vector.load %arg5[%c1_105, %c0_106, %c0_107] : memref<2x32x32xf32, #tpu.memory_space<vmem>>, vector<1x32x32xf32>
    %272 = vector.shape_cast %271 : vector<1x32x32xf32> to vector<32x32xf32>
    %cst_108 = arith.constant dense<0.000000e+00> : vector<8x32xf32>
    %273 = tpu.matmul %270, %272, %cst_108 {dimension_numbers = #tpu.dot_dimension_numbers<[1], [0], [0], [1], [0, 0, 1, 1], [], []>} : vector<8x32xf32>, vector<32x32xf32>, vector<8x32xf32> -> vector<8x32xf32>
    %c1_109 = arith.constant 1 : index
    %c0_110 = arith.constant 0 : index
    %c0_111 = arith.constant 0 : index
    %274 = vector.load %arg6[%c1_109, %c0_110, %c0_111] : memref<2x1x32xf32, #tpu.memory_space<vmem>>, vector<1x1x32xf32>
    %275 = vector.shape_cast %274 : vector<1x1x32xf32> to vector<1x32xf32>
    %276 = vector.broadcast %275 : vector<1x32xf32> to vector<8x32xf32>
    %277 = arith.addf %273, %276 : vector<8x32xf32>
    %278 = arith.addf %164, %277 : vector<8x32xf32>
    %c1_112 = arith.constant 1 : index
    %c0_113 = arith.constant 0 : index
    %c0_114 = arith.constant 0 : index
    %279 = vector.load %arg7[%c1_112, %c0_113, %c0_114] : memref<2x1x32xf32, #tpu.memory_space<vmem>>, vector<1x1x32xf32>
    %280 = vector.shape_cast %279 : vector<1x1x32xf32> to vector<1x32xf32>
    %c1_115 = arith.constant 1 : index
    %c0_116 = arith.constant 0 : index
    %c0_117 = arith.constant 0 : index
    %281 = vector.load %arg8[%c1_115, %c0_116, %c0_117] : memref<2x1x32xf32, #tpu.memory_space<vmem>>, vector<1x1x32xf32>
    %282 = vector.shape_cast %281 : vector<1x1x32xf32> to vector<1x32xf32>
    %cst_118 = arith.constant dense<0.000000e+00> : vector<8xf32>
    %283 = vector.multi_reduction <add>, %278, %cst_118 [1] : vector<8x32xf32> to vector<8xf32>
    %284 = vector.shape_cast %283 : vector<8xf32> to vector<8x1xf32>
    %cst_119 = arith.constant 3.200000e+01 : f32
    %285 = vector.broadcast %cst_119 : f32 to vector<8x1xf32>
    %286 = arith.divf %284, %285 : vector<8x1xf32>
    %287 = vector.broadcast %286 : vector<8x1xf32> to vector<8x32xf32>
    %288 = arith.subf %278, %287 : vector<8x32xf32>
    %289 = arith.mulf %288, %288 : vector<8x32xf32>
    %cst_120 = arith.constant dense<0.000000e+00> : vector<8xf32>
    %290 = vector.multi_reduction <add>, %289, %cst_120 [1] : vector<8x32xf32> to vector<8xf32>
    %291 = vector.shape_cast %290 : vector<8xf32> to vector<8x1xf32>
    %cst_121 = arith.constant 3.200000e+01 : f32
    %292 = vector.broadcast %cst_121 : f32 to vector<8x1xf32>
    %293 = arith.divf %291, %292 : vector<8x1xf32>
    %294 = vector.broadcast %286 : vector<8x1xf32> to vector<8x32xf32>
    %295 = arith.subf %278, %294 : vector<8x32xf32>
    %cst_122 = arith.constant 9.99999974E-6 : f32
    %296 = vector.broadcast %cst_122 : f32 to vector<8x1xf32>
    %297 = arith.addf %293, %296 : vector<8x1xf32>
    %298 = math.rsqrt %297 : vector<8x1xf32>
    %299 = vector.broadcast %298 : vector<8x1xf32> to vector<8x32xf32>
    %300 = arith.mulf %295, %299 : vector<8x32xf32>
    %301 = vector.broadcast %280 : vector<1x32xf32> to vector<8x32xf32>
    %302 = arith.mulf %300, %301 : vector<8x32xf32>
    %303 = vector.broadcast %282 : vector<1x32xf32> to vector<8x32xf32>
    %304 = arith.addf %302, %303 : vector<8x32xf32>
    %c1_123 = arith.constant 1 : index
    %c0_124 = arith.constant 0 : index
    %c0_125 = arith.constant 0 : index
    %305 = vector.load %arg9[%c1_123, %c0_124, %c0_125] : memref<2x32x128xf32, #tpu.memory_space<vmem>>, vector<1x32x128xf32>
    %306 = vector.shape_cast %305 : vector<1x32x128xf32> to vector<32x128xf32>
    %cst_126 = arith.constant dense<0.000000e+00> : vector<8x128xf32>
    %307 = tpu.matmul %304, %306, %cst_126 {dimension_numbers = #tpu.dot_dimension_numbers<[1], [0], [0], [1], [0, 0, 1, 1], [], []>} : vector<8x32xf32>, vector<32x128xf32>, vector<8x128xf32> -> vector<8x128xf32>
    %c1_127 = arith.constant 1 : index
    %c0_128 = arith.constant 0 : index
    %c0_129 = arith.constant 0 : index
    %308 = vector.load %arg10[%c1_127, %c0_128, %c0_129] : memref<2x1x128xf32, #tpu.memory_space<vmem>>, vector<1x1x128xf32>
    %309 = vector.shape_cast %308 : vector<1x1x128xf32> to vector<1x128xf32>
    %310 = vector.broadcast %309 : vector<1x128xf32> to vector<8x128xf32>
    %311 = arith.addf %307, %310 : vector<8x128xf32>
    %cst_130 = arith.constant 0.000000e+00 : f32
    %312 = vector.broadcast %cst_130 : f32 to vector<8x128xf32>
    %313 = arith.maximumf %311, %312 : vector<8x128xf32>
    %c1_131 = arith.constant 1 : index
    %c0_132 = arith.constant 0 : index
    %c0_133 = arith.constant 0 : index
    %314 = vector.load %arg11[%c1_131, %c0_132, %c0_133] : memref<2x128x32xf32, #tpu.memory_space<vmem>>, vector<1x128x32xf32>
    %315 = vector.shape_cast %314 : vector<1x128x32xf32> to vector<128x32xf32>
    %cst_134 = arith.constant dense<0.000000e+00> : vector<8x32xf32>
    %316 = tpu.matmul %313, %315, %cst_134 {dimension_numbers = #tpu.dot_dimension_numbers<[1], [0], [0], [1], [0, 0, 1, 1], [], []>} : vector<8x128xf32>, vector<128x32xf32>, vector<8x32xf32> -> vector<8x32xf32>
    %c1_135 = arith.constant 1 : index
    %c0_136 = arith.constant 0 : index
    %c0_137 = arith.constant 0 : index
    %317 = vector.load %arg12[%c1_135, %c0_136, %c0_137] : memref<2x1x32xf32, #tpu.memory_space<vmem>>, vector<1x1x32xf32>
    %318 = vector.shape_cast %317 : vector<1x1x32xf32> to vector<1x32xf32>
    %319 = vector.broadcast %318 : vector<1x32xf32> to vector<8x32xf32>
    %320 = arith.addf %316, %319 : vector<8x32xf32>
    %321 = arith.addf %278, %320 : vector<8x32xf32>
    %c0_138 = arith.constant 0 : index
    %c0_139 = arith.constant 0 : index
    %322 = vector.load %arg13[%c0_138, %c0_139] : memref<1x32xf32, #tpu.memory_space<vmem>>, vector<1x32xf32>
    %c0_140 = arith.constant 0 : index
    %c0_141 = arith.constant 0 : index
    %323 = vector.load %arg14[%c0_140, %c0_141] : memref<1x32xf32, #tpu.memory_space<vmem>>, vector<1x32xf32>
    %cst_142 = arith.constant dense<0.000000e+00> : vector<8xf32>
    %324 = vector.multi_reduction <add>, %321, %cst_142 [1] : vector<8x32xf32> to vector<8xf32>
    %325 = vector.shape_cast %324 : vector<8xf32> to vector<8x1xf32>
    %cst_143 = arith.constant 3.200000e+01 : f32
    %326 = vector.broadcast %cst_143 : f32 to vector<8x1xf32>
    %327 = arith.divf %325, %326 : vector<8x1xf32>
    %328 = vector.broadcast %327 : vector<8x1xf32> to vector<8x32xf32>
    %329 = arith.subf %321, %328 : vector<8x32xf32>
    %330 = arith.mulf %329, %329 : vector<8x32xf32>
    %cst_144 = arith.constant dense<0.000000e+00> : vector<8xf32>
    %331 = vector.multi_reduction <add>, %330, %cst_144 [1] : vector<8x32xf32> to vector<8xf32>
    %332 = vector.shape_cast %331 : vector<8xf32> to vector<8x1xf32>
    %cst_145 = arith.constant 3.200000e+01 : f32
    %333 = vector.broadcast %cst_145 : f32 to vector<8x1xf32>
    %334 = arith.divf %332, %333 : vector<8x1xf32>
    %335 = vector.broadcast %327 : vector<8x1xf32> to vector<8x32xf32>
    %336 = arith.subf %321, %335 : vector<8x32xf32>
    %cst_146 = arith.constant 9.99999974E-6 : f32
    %337 = vector.broadcast %cst_146 : f32 to vector<8x1xf32>
    %338 = arith.addf %334, %337 : vector<8x1xf32>
    %339 = math.rsqrt %338 : vector<8x1xf32>
    %340 = vector.broadcast %339 : vector<8x1xf32> to vector<8x32xf32>
    %341 = arith.mulf %336, %340 : vector<8x32xf32>
    %342 = vector.broadcast %322 : vector<1x32xf32> to vector<8x32xf32>
    %343 = arith.mulf %341, %342 : vector<8x32xf32>
    %344 = vector.broadcast %323 : vector<1x32xf32> to vector<8x32xf32>
    %345 = arith.addf %343, %344 : vector<8x32xf32>
    %c0_147 = arith.constant 0 : index
    %c0_148 = arith.constant 0 : index
    %346 = vector.load %arg15[%c0_147, %c0_148] : memref<32x128xf32, #tpu.memory_space<vmem>>, vector<32x128xf32>
    %cst_149 = arith.constant dense<0.000000e+00> : vector<8x128xf32>
    %347 = tpu.matmul %345, %346, %cst_149 {dimension_numbers = #tpu.dot_dimension_numbers<[1], [0], [0], [1], [0, 0, 1, 1], [], []>} : vector<8x32xf32>, vector<32x128xf32>, vector<8x128xf32> -> vector<8x128xf32>
    %c0_150 = arith.constant 0 : index
    %c0_151 = arith.constant 0 : index
    %348 = vector.load %arg16[%c0_150, %c0_151] : memref<1x128xf32, #tpu.memory_space<vmem>>, vector<1x128xf32>
    %349 = vector.broadcast %348 : vector<1x128xf32> to vector<8x128xf32>
    %350 = arith.addf %347, %349 : vector<8x128xf32>
    %c0_152 = arith.constant 0 : index
    %c0_153 = arith.constant 0 : index
    %c0_154 = arith.constant 0 : index
    %351 = vector.load %arg17[%c0_152, %c0_153, %c0_154] : memref<1x8x128xf32, #tpu.memory_space<vmem>>, vector<1x8x128xf32>
    %352 = vector.shape_cast %351 : vector<1x8x128xf32> to vector<8x128xf32>
    %353 = vector.shape_cast %350 : vector<8x128xf32> to vector<1x8x128xf32>
    tpu.vector_store %arg17[%c0_152, %c0_153, %c0_154], %353 {strides = array<i32>} : memref<1x8x128xf32, #tpu.memory_space<vmem>>, vector<1x8x128xf32>,
    return
  }
  func.func @transform_0(%arg0: i32) -> (i32, i32, i32) {
    %c0_i32 = arith.constant 0 : i32
    %c0_i32_0 = arith.constant 0 : i32
    %c0_i32_1 = arith.constant 0 : i32
    return %arg0, %c0_i32, %c0_i32_0 : i32, i32, i32
  }
  func.func @transform_1(%arg0: i32) -> (i32, i32, i32) {
    %c0_i32 = arith.constant 0 : i32
    %c0_i32_0 = arith.constant 0 : i32
    %c0_i32_1 = arith.constant 0 : i32
    %c0_i32_2 = arith.constant 0 : i32
    return %c0_i32, %c0_i32_0, %c0_i32_1 : i32, i32, i32
  }
  func.func @transform_2(%arg0: i32) -> (i32, i32, i32) {
    %c0_i32 = arith.constant 0 : i32
    %c0_i32_0 = arith.constant 0 : i32
    %c0_i32_1 = arith.constant 0 : i32
    %c0_i32_2 = arith.constant 0 : i32
    return %c0_i32, %c0_i32_0, %c0_i32_1 : i32, i32, i32
  }
  func.func @transform_3(%arg0: i32) -> (i32, i32, i32) {
    %c0_i32 = arith.constant 0 : i32
    %c0_i32_0 = arith.constant 0 : i32
    %c0_i32_1 = arith.constant 0 : i32
    %c0_i32_2 = arith.constant 0 : i32
    return %c0_i32, %c0_i32_0, %c0_i32_1 : i32, i32, i32
  }
  func.func @transform_4(%arg0: i32) -> (i32, i32, i32) {
    %c0_i32 = arith.constant 0 : i32
    %c0_i32_0 = arith.constant 0 : i32
    %c0_i32_1 = arith.constant 0 : i32
    %c0_i32_2 = arith.constant 0 : i32
    return %c0_i32, %c0_i32_0, %c0_i32_1 : i32, i32, i32
  }
  func.func @transform_5(%arg0: i32) -> (i32, i32, i32) {
    %c0_i32 = arith.constant 0 : i32
    %c0_i32_0 = arith.constant 0 : i32
    %c0_i32_1 = arith.constant 0 : i32
    %c0_i32_2 = arith.constant 0 : i32
    return %c0_i32, %c0_i32_0, %c0_i32_1 : i32, i32, i32
  }
  func.func @transform_6(%arg0: i32) -> (i32, i32, i32) {
    %c0_i32 = arith.constant 0 : i32
    %c0_i32_0 = arith.constant 0 : i32
    %c0_i32_1 = arith.constant 0 : i32
    %c0_i32_2 = arith.constant 0 : i32
    return %c0_i32, %c0_i32_0, %c0_i32_1 : i32, i32, i32
  }
  func.func @transform_7(%arg0: i32) -> (i32, i32, i32) {
    %c0_i32 = arith.constant 0 : i32
    %c0_i32_0 = arith.constant 0 : i32
    %c0_i32_1 = arith.constant 0 : i32
    %c0_i32_2 = arith.constant 0 : i32
    return %c0_i32, %c0_i32_0, %c0_i32_1 : i32, i32, i32
  }
  func.func @transform_8(%arg0: i32) -> (i32, i32, i32) {
    %c0_i32 = arith.constant 0 : i32
    %c0_i32_0 = arith.constant 0 : i32
    %c0_i32_1 = arith.constant 0 : i32
    %c0_i32_2 = arith.constant 0 : i32
    return %c0_i32, %c0_i32_0, %c0_i32_1 : i32, i32, i32
  }
  func.func @transform_9(%arg0: i32) -> (i32, i32, i32) {
    %c0_i32 = arith.constant 0 : i32
    %c0_i32_0 = arith.constant 0 : i32
    %c0_i32_1 = arith.constant 0 : i32
    %c0_i32_2 = arith.constant 0 : i32
    return %c0_i32, %c0_i32_0, %c0_i32_1 : i32, i32, i32
  }
  func.func @transform_10(%arg0: i32) -> (i32, i32, i32) {
    %c0_i32 = arith.constant 0 : i32
    %c0_i32_0 = arith.constant 0 : i32
    %c0_i32_1 = arith.constant 0 : i32
    %c0_i32_2 = arith.constant 0 : i32
    return %c0_i32, %c0_i32_0, %c0_i32_1 : i32, i32, i32
  }
  func.func @transform_11(%arg0: i32) -> (i32, i32, i32) {
    %c0_i32 = arith.constant 0 : i32
    %c0_i32_0 = arith.constant 0 : i32
    %c0_i32_1 = arith.constant 0 : i32
    %c0_i32_2 = arith.constant 0 : i32
    return %c0_i32, %c0_i32_0, %c0_i32_1 : i32, i32, i32
  }
  func.func @transform_12(%arg0: i32) -> (i32, i32) {
    %c0_i32 = arith.constant 0 : i32
    %c0_i32_0 = arith.constant 0 : i32
    %c0_i32_1 = arith.constant 0 : i32
    return %c0_i32, %c0_i32_0 : i32, i32
  }
  func.func @transform_13(%arg0: i32) -> (i32, i32) {
    %c0_i32 = arith.constant 0 : i32
    %c0_i32_0 = arith.constant 0 : i32
    %c0_i32_1 = arith.constant 0 : i32
    return %c0_i32, %c0_i32_0 : i32, i32
  }
  func.func @transform_14(%arg0: i32) -> (i32, i32) {
    %c0_i32 = arith.constant 0 : i32
    %c0_i32_0 = arith.constant 0 : i32
    %c0_i32_1 = arith.constant 0 : i32
    return %c0_i32, %c0_i32_0 : i32, i32
  }
  func.func @transform_15(%arg0: i32) -> (i32, i32) {
    %c0_i32 = arith.constant 0 : i32
    %c0_i32_0 = arith.constant 0 : i32
    %c0_i32_1 = arith.constant 0 : i32
    return %c0_i32, %c0_i32_0 : i32, i32
  }
  func.func @transform_16(%arg0: i32) -> (i32, i32, i32) {
    %c0_i32 = arith.constant 0 : i32
    %c0_i32_0 = arith.constant 0 : i32
    %c0_i32_1 = arith.constant 0 : i32
    return %arg0, %c0_i32, %c0_i32_0 : i32, i32, i32
  }
}

</mosaic_0001>

<llo_original>
// kernel: gpt_forward.1
$region0: #{gpt_forward.1}
  #allocation0 [shape = 'u32[]', space=smem, size = 0x4, offset = 0x4, fixed_abs, tag = 'smem constant byte address 0x4 - core index']
  #allocation1 [shape = 'u32[72,128]{1,0:T(1,128)}', space=vmem, size = 0x9000, scoped, tag = 'internal scratch']
  %s0 = inlined_call_operand.vmem [shape: f32[2,8,32], index: 0, kind: input, shape index: {}]
  %s1 = inlined_call_operand.vmem [shape: f32[2,1,32], index: 1, kind: input, shape index: {}]
  %s2 = inlined_call_operand.vmem [shape: f32[2,1,32], index: 2, kind: input, shape index: {}]
  %s3 = inlined_call_operand.vmem [shape: f32[2,32,96], index: 3, kind: input, shape index: {}]
  %s4 = inlined_call_operand.vmem [shape: f32[2,32,32], index: 4, kind: input, shape index: {}]
  %s5 = inlined_call_operand.vmem [shape: f32[2,1,32], index: 5, kind: input, shape index: {}]
  %s6 = inlined_call_operand.vmem [shape: f32[2,1,32], index: 6, kind: input, shape index: {}]
  %s7 = inlined_call_operand.vmem [shape: f32[2,1,32], index: 7, kind: input, shape index: {}]
  %s8 = inlined_call_operand.vmem [shape: f32[2,32,128], index: 8, kind: input, shape index: {}]
  %s9 = inlined_call_operand.vmem [shape: f32[2,1,128], index: 9, kind: input, shape index: {}]
  %s10 = inlined_call_operand.vmem [shape: f32[2,128,32], index: 10, kind: input, shape index: {}]
  %s11 = inlined_call_operand.vmem [shape: f32[2,1,32], index: 11, kind: input, shape index: {}]
  %s12 = inlined_call_operand.vmem [shape: f32[1,32], index: 12, kind: input, shape index: {}]
  %s13 = inlined_call_operand.vmem [shape: f32[1,32], index: 13, kind: input, shape index: {}]
  %s14 = inlined_call_operand.vmem [shape: f32[32,128], index: 14, kind: input, shape index: {}]
  %s15 = inlined_call_operand.vmem [shape: f32[1,128], index: 15, kind: input, shape index: {}]
  %s16 = inlined_call_operand.hbm [shape: f32[2,8,128], index: 16, kind: output, shape index: {}]
  %s17 = sld [smem:[#allocation0]]
  $region97: #{gpt_forward.1} parent=0
    _
  %s19 = ssub.s32 1, %s17
  %s20 = scalar_select 0, %s19, %s17
  $region1: #{gpt_forward.1} parent=0
    #allocation2 [shape = 'u8[8192]{0}', space=vmem, size = 0x2000, scoped, tag = 'output window, operand 0']
    #allocation3 [shape = 's32[2]{0}', space=sflag, size = 0x8, scoped, tag = 'scoped memory for gpt_forward.1']
    %21 = vsyncpa [#allocation3], 0
    %s22 = scalar_lea.sflag [#allocation3], 1
    %23 = vsyncpa %s22, 0
    loop: start=0, step=1, limit=4
    $region2: #{gpt_forward.1} parent=1 // loop_pre_header
      _
    $region3: #{gpt_forward.1} parent=1 // loop_header
      %s25 = sphi 0, %s29
      %p26 = scmp.ge.s32.totalorder %s25, 4
      %s35 = sphi 0, %s37
      %s38 = sphi 0, %s35
      %s39 = sphi 0, %s38
      %s55 = sphi 0, %s39
      %s59 = sphi 0, %s59
      %s61 = sphi 0, %s59
      %s62 = sphi 0, %s61
      %s76 = sphi 0, %s62
      %s80 = sphi 0, %s80
      %s82 = sphi 0, %s80
      %s83 = sphi 0, %s82
      %s97 = sphi 0, %s83
      %s101 = sphi 0, %s101
      %s103 = sphi 0, %s101
      %s104 = sphi 0, %s103
      %s118 = sphi 0, %s104
      %s122 = sphi 0, %s122
      %s124 = sphi 0, %s122
      %s125 = sphi 0, %s124
      %s139 = sphi 0, %s125
      %s143 = sphi 0, %s143
      %s145 = sphi 0, %s143
      %s146 = sphi 0, %s145
      %s160 = sphi 0, %s146
      %s164 = sphi 0, %s164
      %s166 = sphi 0, %s164
      %s167 = sphi 0, %s166
      %s181 = sphi 0, %s167
      %s185 = sphi 0, %s185
      %s187 = sphi 0, %s185
      %s188 = sphi 0, %s187
      %s202 = sphi 0, %s188
      %s206 = sphi 0, %s206
      %s208 = sphi 0, %s206
      %s209 = sphi 0, %s208
      %s223 = sphi 0, %s209
      %s227 = sphi 0, %s227
      %s229 = sphi 0, %s227
      %s230 = sphi 0, %s229
      %s244 = sphi 0, %s230
      %s248 = sphi 0, %s248
      %s250 = sphi 0, %s248
      %s251 = sphi 0, %s250
      %s265 = sphi 0, %s251
      %s269 = sphi 0, %s269
      %s271 = sphi 0, %s269
      %s272 = sphi 0, %s271
      %s286 = sphi 0, %s272
      %s290 = sphi 0, %s290
      %s292 = sphi 0, %s290
      %s293 = sphi 0, %s292
      %s307 = sphi 0, %s293
      %s311 = sphi 0, %s311
      %s313 = sphi 0, %s311
      %s314 = sphi 0, %s313
      %s328 = sphi 0, %s314
      %s332 = sphi 0, %s332
      %s334 = sphi 0, %s332
      %s335 = sphi 0, %s334
      %s349 = sphi 0, %s335
      %s353 = sphi 0, %s353
      %s355 = sphi 0, %s353
      %s356 = sphi 0, %s355
      %s370 = sphi 0, %s356
      %s376 = sphi 0, %s378
      %s379 = sphi 0, %s376
      %s380 = sphi 0, %s379
      %s396 = sphi 0, %s380
    $region4: #{gpt_forward.1} parent=1 // loop_header_branch
      %28 = sbr.rel (%p26) target = $region8
    $region5: #{gpt_forward.1} parent=1 // loop_body
      %s30 = ssub.s32 %s25, 1
      %s31 = ssub.s32 %s25, 2
      %s32 = sadd.s32 %s25, 1
      %s33 = ssub.s32 %s25, %s32
      %p34 = scmp.eq.s32.totalorder %s33, 0
      %s36 = sadd.s32 %s35, 1
      %s37 = scalar_select %p34, %s35, %s36
      %p40 = pneg %p34
      %p41 = scmp.eq.s32.totalorder %s25, 1
      %p42 = por %p40, %p41
      %p43 = scmp.ne.s32.totalorder %s35, %s38
      %p44 = scmp.eq.s32.totalorder %s25, 0
      %p45 = por %p43, %p44
      %p46 = scmp.ne.s32.totalorder %s35, %s38
      %p47 = scmp.eq.s32.totalorder %s30, 1
      %p48 = por %p46, %p47
      %p49 = scmp.ne.s32.totalorder %s38, %s39
      %p50 = scmp.eq.s32.totalorder %s30, 0
      %p51 = por %p49, %p50
      %p52 = scmp.ne.s32.totalorder %s38, %s39
      %p53 = scmp.eq.s32.totalorder %s31, 1
      %p54 = por %p52, %p53
      %p56 = scmp.ne.s32.totalorder %s39, %s55
      %p57 = scmp.eq.s32.totalorder %s31, 0
      %p58 = por %p56, %p57
      %s60 = sadd.s32 %s59, 1
      %p63 = scmp.eq.s32.totalorder %s25, 1
      %p64 = scmp.ne.s32.totalorder %s59, %s61
      %p65 = scmp.eq.s32.totalorder %s25, 0
      %p66 = por %p64, %p65
      %p67 = scmp.ne.s32.totalorder %s59, %s61
      %p68 = scmp.eq.s32.totalorder %s30, 1
      %p69 = por %p67, %p68
      %p70 = scmp.ne.s32.totalorder %s61, %s62
      %p71 = scmp.eq.s32.totalorder %s30, 0
      %p72 = por %p70, %p71
      %p73 = scmp.ne.s32.totalorder %s61, %s62
      %p74 = scmp.eq.s32.totalorder %s31, 1
      %p75 = por %p73, %p74
      %p77 = scmp.ne.s32.totalorder %s62, %s76
      %p78 = scmp.eq.s32.totalorder %s31, 0
      %p79 = por %p77, %p78
      %s81 = sadd.s32 %s80, 1
      %p84 = scmp.eq.s32.totalorder %s25, 1
      %p85 = scmp.ne.s32.totalorder %s80, %s82
      %p86 = scmp.eq.s32.totalorder %s25, 0
      %p87 = por %p85, %p86
      %p88 = scmp.ne.s32.totalorder %s80, %s82
      %p89 = scmp.eq.s32.totalorder %s30, 1
      %p90 = por %p88, %p89
      %p91 = scmp.ne.s32.totalorder %s82, %s83
      %p92 = scmp.eq.s32.totalorder %s30, 0
      %p93 = por %p91, %p92
      %p94 = scmp.ne.s32.totalorder %s82, %s83
      %p95 = scmp.eq.s32.totalorder %s31, 1
      %p96 = por %p94, %p95
      %p98 = scmp.ne.s32.totalorder %s83, %s97
      %p99 = scmp.eq.s32.totalorder %s31, 0
      %p100 = por %p98, %p99
      %s102 = sadd.s32 %s101, 1
      %p105 = scmp.eq.s32.totalorder %s25, 1
      %p106 = scmp.ne.s32.totalorder %s101, %s103
      %p107 = scmp.eq.s32.totalorder %s25, 0
      %p108 = por %p106, %p107
      %p109 = scmp.ne.s32.totalorder %s101, %s103
      %p110 = scmp.eq.s32.totalorder %s30, 1
      %p111 = por %p109, %p110
      %p112 = scmp.ne.s32.totalorder %s103, %s104
      %p113 = scmp.eq.s32.totalorder %s30, 0
      %p114 = por %p112, %p113
      %p115 = scmp.ne.s32.totalorder %s103, %s104
      %p116 = scmp.eq.s32.totalorder %s31, 1
      %p117 = por %p115, %p116
      %p119 = scmp.ne.s32.totalorder %s104, %s118
      %p120 = scmp.eq.s32.totalorder %s31, 0
      %p121 = por %p119, %p120
      %s123 = sadd.s32 %s122, 1
      %p126 = scmp.eq.s32.totalorder %s25, 1
      %p127 = scmp.ne.s32.totalorder %s122, %s124
      %p128 = scmp.eq.s32.totalorder %s25, 0
      %p129 = por %p127, %p128
      %p130 = scmp.ne.s32.totalorder %s122, %s124
      %p131 = scmp.eq.s32.totalorder %s30, 1
      %p132 = por %p130, %p131
      %p133 = scmp.ne.s32.totalorder %s124, %s125
      %p134 = scmp.eq.s32.totalorder %s30, 0
      %p135 = por %p133, %p134
      %p136 = scmp.ne.s32.totalorder %s124, %s125
      %p137 = scmp.eq.s32.totalorder %s31, 1
      %p138 = por %p136, %p137
      %p140 = scmp.ne.s32.totalorder %s125, %s139
      %p141 = scmp.eq.s32.totalorder %s31, 0
      %p142 = por %p140, %p141
      %s144 = sadd.s32 %s143, 1
      %p147 = scmp.eq.s32.totalorder %s25, 1
      %p148 = scmp.ne.s32.totalorder %s143, %s145
      %p149 = scmp.eq.s32.totalorder %s25, 0
      %p150 = por %p148, %p149
      %p151 = scmp.ne.s32.totalorder %s143, %s145
      %p152 = scmp.eq.s32.totalorder %s30, 1
      %p153 = por %p151, %p152
      %p154 = scmp.ne.s32.totalorder %s145, %s146
      %p155 = scmp.eq.s32.totalorder %s30, 0
      %p156 = por %p154, %p155
      %p157 = scmp.ne.s32.totalorder %s145, %s146
      %p158 = scmp.eq.s32.totalorder %s31, 1
      %p159 = por %p157, %p158
      %p161 = scmp.ne.s32.totalorder %s146, %s160
      %p162 = scmp.eq.s32.totalorder %s31, 0
      %p163 = por %p161, %p162
      %s165 = sadd.s32 %s164, 1
      %p168 = scmp.eq.s32.totalorder %s25, 1
      %p169 = scmp.ne.s32.totalorder %s164, %s166
      %p170 = scmp.eq.s32.totalorder %s25, 0
      %p171 = por %p169, %p170
      %p172 = scmp.ne.s32.totalorder %s164, %s166
      %p173 = scmp.eq.s32.totalorder %s30, 1
      %p174 = por %p172, %p173
      %p175 = scmp.ne.s32.totalorder %s166, %s167
      %p176 = scmp.eq.s32.totalorder %s30, 0
      %p177 = por %p175, %p176
      %p178 = scmp.ne.s32.totalorder %s166, %s167
      %p179 = scmp.eq.s32.totalorder %s31, 1
      %p180 = por %p178, %p179
      %p182 = scmp.ne.s32.totalorder %s167, %s181
      %p183 = scmp.eq.s32.totalorder %s31, 0
      %p184 = por %p182, %p183
      %s186 = sadd.s32 %s185, 1
      %p189 = scmp.eq.s32.totalorder %s25, 1
      %p190 = scmp.ne.s32.totalorder %s185, %s187
      %p191 = scmp.eq.s32.totalorder %s25, 0
      %p192 = por %p190, %p191
      %p193 = scmp.ne.s32.totalorder %s185, %s187
      %p194 = scmp.eq.s32.totalorder %s30, 1
      %p195 = por %p193, %p194
      %p196 = scmp.ne.s32.totalorder %s187, %s188
      %p197 = scmp.eq.s32.totalorder %s30, 0
      %p198 = por %p196, %p197
      %p199 = scmp.ne.s32.totalorder %s187, %s188
      %p200 = scmp.eq.s32.totalorder %s31, 1
      %p201 = por %p199, %p200
      %p203 = scmp.ne.s32.totalorder %s188, %s202
      %p204 = scmp.eq.s32.totalorder %s31, 0
      %p205 = por %p203, %p204
      %s207 = sadd.s32 %s206, 1
      %p210 = scmp.eq.s32.totalorder %s25, 1
      %p211 = scmp.ne.s32.totalorder %s206, %s208
      %p212 = scmp.eq.s32.totalorder %s25, 0
      %p213 = por %p211, %p212
      %p214 = scmp.ne.s32.totalorder %s206, %s208
      %p215 = scmp.eq.s32.totalorder %s30, 1
      %p216 = por %p214, %p215
      %p217 = scmp.ne.s32.totalorder %s208, %s209
      %p218 = scmp.eq.s32.totalorder %s30, 0
      %p219 = por %p217, %p218
      %p220 = scmp.ne.s32.totalorder %s208, %s209
      %p221 = scmp.eq.s32.totalorder %s31, 1
      %p222 = por %p220, %p221
      %p224 = scmp.ne.s32.totalorder %s209, %s223
      %p225 = scmp.eq.s32.totalorder %s31, 0
      %p226 = por %p224, %p225
      %s228 = sadd.s32 %s227, 1
      %p231 = scmp.eq.s32.totalorder %s25, 1
      %p232 = scmp.ne.s32.totalorder %s227, %s229
      %p233 = scmp.eq.s32.totalorder %s25, 0
      %p234 = por %p232, %p233
      %p235 = scmp.ne.s32.totalorder %s227, %s229
      %p236 = scmp.eq.s32.totalorder %s30, 1
      %p237 = por %p235, %p236
      %p238 = scmp.ne.s32.totalorder %s229, %s230
      %p239 = scmp.eq.s32.totalorder %s30, 0
      %p240 = por %p238, %p239
      %p241 = scmp.ne.s32.totalorder %s229, %s230
      %p242 = scmp.eq.s32.totalorder %s31, 1
      %p243 = por %p241, %p242
      %p245 = scmp.ne.s32.totalorder %s230, %s244
      %p246 = scmp.eq.s32.totalorder %s31, 0
      %p247 = por %p245, %p246
      %s249 = sadd.s32 %s248, 1
      %p252 = scmp.eq.s32.totalorder %s25, 1
      %p253 = scmp.ne.s32.totalorder %s248, %s250
      %p254 = scmp.eq.s32.totalorder %s25, 0
      %p255 = por %p253, %p254
      %p256 = scmp.ne.s32.totalorder %s248, %s250
      %p257 = scmp.eq.s32.totalorder %s30, 1
      %p258 = por %p256, %p257
      %p259 = scmp.ne.s32.totalorder %s250, %s251
      %p260 = scmp.eq.s32.totalorder %s30, 0
      %p261 = por %p259, %p260
      %p262 = scmp.ne.s32.totalorder %s250, %s251
      %p263 = scmp.eq.s32.totalorder %s31, 1
      %p264 = por %p262, %p263
      %p266 = scmp.ne.s32.totalorder %s251, %s265
      %p267 = scmp.eq.s32.totalorder %s31, 0
      %p268 = por %p266, %p267
      %s270 = sadd.s32 %s269, 1
      %p273 = scmp.eq.s32.totalorder %s25, 1
      %p274 = scmp.ne.s32.totalorder %s269, %s271
      %p275 = scmp.eq.s32.totalorder %s25, 0
      %p276 = por %p274, %p275
      %p277 = scmp.ne.s32.totalorder %s269, %s271
      %p278 = scmp.eq.s32.totalorder %s30, 1
      %p279 = por %p277, %p278
      %p280 = scmp.ne.s32.totalorder %s271, %s272
      %p281 = scmp.eq.s32.totalorder %s30, 0
      %p282 = por %p280, %p281
      %p283 = scmp.ne.s32.totalorder %s271, %s272
      %p284 = scmp.eq.s32.totalorder %s31, 1
      %p285 = por %p283, %p284
      %p287 = scmp.ne.s32.totalorder %s272, %s286
      %p288 = scmp.eq.s32.totalorder %s31, 0
      %p289 = por %p287, %p288
      %s291 = sadd.s32 %s290, 1
      %p294 = scmp.eq.s32.totalorder %s25, 1
      %p295 = scmp.ne.s32.totalorder %s290, %s292
      %p296 = scmp.eq.s32.totalorder %s25, 0
      %p297 = por %p295, %p296
      %p298 = scmp.ne.s32.totalorder %s290, %s292
      %p299 = scmp.eq.s32.totalorder %s30, 1
      %p300 = por %p298, %p299
      %p301 = scmp.ne.s32.totalorder %s292, %s293
      %p302 = scmp.eq.s32.totalorder %s30, 0
      %p303 = por %p301, %p302
      %p304 = scmp.ne.s32.totalorder %s292, %s293
      %p305 = scmp.eq.s32.totalorder %s31, 1
      %p306 = por %p304, %p305
      %p308 = scmp.ne.s32.totalorder %s293, %s307
      %p309 = scmp.eq.s32.totalorder %s31, 0
      %p310 = por %p308, %p309
      %s312 = sadd.s32 %s311, 1
      %p315 = scmp.eq.s32.totalorder %s25, 1
      %p316 = scmp.ne.s32.totalorder %s311, %s313
      %p317 = scmp.eq.s32.totalorder %s25, 0
      %p318 = por %p316, %p317
      %p319 = scmp.ne.s32.totalorder %s311, %s313
      %p320 = scmp.eq.s32.totalorder %s30, 1
      %p321 = por %p319, %p320
      %p322 = scmp.ne.s32.totalorder %s313, %s314
      %p323 = scmp.eq.s32.totalorder %s30, 0
      %p324 = por %p322, %p323
      %p325 = scmp.ne.s32.totalorder %s313, %s314
      %p326 = scmp.eq.s32.totalorder %s31, 1
      %p327 = por %p325, %p326
      %p329 = scmp.ne.s32.totalorder %s314, %s328
      %p330 = scmp.eq.s32.totalorder %s31, 0
      %p331 = por %p329, %p330
      %s333 = sadd.s32 %s332, 1
      %p336 = scmp.eq.s32.totalorder %s25, 1
      %p337 = scmp.ne.s32.totalorder %s332, %s334
      %p338 = scmp.eq.s32.totalorder %s25, 0
      %p339 = por %p337, %p338
      %p340 = scmp.ne.s32.totalorder %s332, %s334
      %p341 = scmp.eq.s32.totalorder %s30, 1
      %p342 = por %p340, %p341
      %p343 = scmp.ne.s32.totalorder %s334, %s335
      %p344 = scmp.eq.s32.totalorder %s30, 0
      %p345 = por %p343, %p344
      %p346 = scmp.ne.s32.totalorder %s334, %s335
      %p347 = scmp.eq.s32.totalorder %s31, 1
      %p348 = por %p346, %p347
      %p350 = scmp.ne.s32.totalorder %s335, %s349
      %p351 = scmp.eq.s32.totalorder %s31, 0
      %p352 = por %p350, %p351
      %s354 = sadd.s32 %s353, 1
      %p357 = scmp.eq.s32.totalorder %s25, 1
      %p358 = scmp.ne.s32.totalorder %s353, %s355
      %p359 = scmp.eq.s32.totalorder %s25, 0
      %p360 = por %p358, %p359
      %p361 = scmp.ne.s32.totalorder %s353, %s355
      %p362 = scmp.eq.s32.totalorder %s30, 1
      %p363 = por %p361, %p362
      %p364 = scmp.ne.s32.totalorder %s355, %s356
      %p365 = scmp.eq.s32.totalorder %s30, 0
      %p366 = por %p364, %p365
      %p367 = scmp.ne.s32.totalorder %s355, %s356
      %p368 = scmp.eq.s32.totalorder %s31, 1
      %p369 = por %p367, %p368
      %p371 = scmp.ne.s32.totalorder %s356, %s370
      %p372 = scmp.eq.s32.totalorder %s31, 0
      %p373 = por %p371, %p372
      %s374 = ssub.s32 %s25, %s32
      %p375 = scmp.eq.s32.totalorder %s374, 0
      %s377 = sadd.s32 %s376, 1
      %s378 = scalar_select %p375, %s376, %s377
      %p381 = pneg %p375
      %p382 = scmp.eq.s32.totalorder %s25, 1
      %p383 = por %p381, %p382
      %p384 = scmp.ne.s32.totalorder %s376, %s379
      %p385 = scmp.eq.s32.totalorder %s25, 0
      %p386 = por %p384, %p385
      %p387 = scmp.ne.s32.totalorder %s376, %s379
      %p388 = scmp.eq.s32.totalorder %s30, 1
      %p389 = por %p387, %p388
      %p390 = scmp.ne.s32.totalorder %s379, %s380
      %p391 = scmp.eq.s32.totalorder %s30, 0
      %p392 = por %p390, %p391
      %p393 = scmp.ne.s32.totalorder %s379, %s380
      %p394 = scmp.eq.s32.totalorder %s31, 1
      %p395 = por %p393, %p394
      %p397 = scmp.ne.s32.totalorder %s380, %s396
      %p398 = scmp.eq.s32.totalorder %s31, 0
      %p399 = por %p397, %p398
      %p400 = scmp.le.s32.totalorder 1, %s25
      %p401 = scmp.lt.s32.totalorder %s25, 3
      %p402 = pnand %p400, %p401
      %p403 = pneg %p402
      // Predicated region
      $region9: #{gpt_forward.1} parent=5 // pred_check
        _
      $region10: #{gpt_forward.1} parent=5 // pred_check_branch
        %405 = sbr.rel (%p402) target = $region12
      $region11: #{gpt_forward.1} parent=5 // pred_region
        %s406 = ssub.s32 %s25, 1
        // Predicated region
        $region13: #{gpt_forward.1} parent=11 // pred_check
          %p407 = pneg %p72
        $region14: #{gpt_forward.1} parent=11 // pred_check_branch
          %409 = sbr.rel (%p407) target = $region16
        $region15: #{gpt_forward.1} parent=11 // pred_region
          _
        $region16: #{gpt_forward.1} parent=11 // pred_fallthru
          _
        // Predicated region
        $region17: #{gpt_forward.1} parent=11 // pred_check
          %p410 = pneg %p93
        $region18: #{gpt_forward.1} parent=11 // pred_check_branch
          %412 = sbr.rel (%p410) target = $region20
        $region19: #{gpt_forward.1} parent=11 // pred_region
          _
        $region20: #{gpt_forward.1} parent=11 // pred_fallthru
          _
        // Predicated region
        $region21: #{gpt_forward.1} parent=11 // pred_check
          %p413 = pneg %p114
        $region22: #{gpt_forward.1} parent=11 // pred_check_branch
          %415 = sbr.rel (%p413) target = $region24
        $region23: #{gpt_forward.1} parent=11 // pred_region
          _
        $region24: #{gpt_forward.1} parent=11 // pred_fallthru
          _
        // Predicated region
        $region25: #{gpt_forward.1} parent=11 // pred_check
          %p416 = pneg %p135
        $region26: #{gpt_forward.1} parent=11 // pred_check_branch
          %418 = sbr.rel (%p416) target = $region28
        $region27: #{gpt_forward.1} parent=11 // pred_region
          _
        $region28: #{gpt_forward.1} parent=11 // pred_fallthru
          _
        // Predicated region
        $region29: #{gpt_forward.1} parent=11 // pred_check
          %p419 = pneg %p156
        $region30: #{gpt_forward.1} parent=11 // pred_check_branch
          %421 = sbr.rel (%p419) target = $region32
        $region31: #{gpt_forward.1} parent=11 // pred_region
          _
        $region32: #{gpt_forward.1} parent=11 // pred_fallthru
          _
        // Predicated region
        $region33: #{gpt_forward.1} parent=11 // pred_check
          %p422 = pneg %p177
        $region34: #{gpt_forward.1} parent=11 // pred_check_branch
          %424 = sbr.rel (%p422) target = $region36
        $region35: #{gpt_forward.1} parent=11 // pred_region
          _
        $region36: #{gpt_forward.1} parent=11 // pred_fallthru
          _
        // Predicated region
        $region37: #{gpt_forward.1} parent=11 // pred_check
          %p425 = pneg %p198
        $region38: #{gpt_forward.1} parent=11 // pred_check_branch
          %427 = sbr.rel (%p425) target = $region40
        $region39: #{gpt_forward.1} parent=11 // pred_region
          _
        $region40: #{gpt_forward.1} parent=11 // pred_fallthru
          _
        // Predicated region
        $region41: #{gpt_forward.1} parent=11 // pred_check
          %p428 = pneg %p219
        $region42: #{gpt_forward.1} parent=11 // pred_check_branch
          %430 = sbr.rel (%p428) target = $region44
        $region43: #{gpt_forward.1} parent=11 // pred_region
          _
        $region44: #{gpt_forward.1} parent=11 // pred_fallthru
          _
        // Predicated region
        $region45: #{gpt_forward.1} parent=11 // pred_check
          %p431 = pneg %p240
        $region46: #{gpt_forward.1} parent=11 // pred_check_branch
          %433 = sbr.rel (%p431) target = $region48
        $region47: #{gpt_forward.1} parent=11 // pred_region
          _
        $region48: #{gpt_forward.1} parent=11 // pred_fallthru
          _
        // Predicated region
        $region49: #{gpt_forward.1} parent=11 // pred_check
          %p434 = pneg %p261
        $region50: #{gpt_forward.1} parent=11 // pred_check_branch
          %436 = sbr.rel (%p434) target = $region52
        $region51: #{gpt_forward.1} parent=11 // pred_region
          _
        $region52: #{gpt_forward.1} parent=11 // pred_fallthru
          _
        // Predicated region
        $region53: #{gpt_forward.1} parent=11 // pred_check
          %p437 = pneg %p282
        $region54: #{gpt_forward.1} parent=11 // pred_check_branch
          %439 = sbr.rel (%p437) target = $region56
        $region55: #{gpt_forward.1} parent=11 // pred_region
          _
        $region56: #{gpt_forward.1} parent=11 // pred_fallthru
          _
        // Predicated region
        $region57: #{gpt_forward.1} parent=11 // pred_check
          %p440 = pneg %p303
        $region58: #{gpt_forward.1} parent=11 // pred_check_branch
          %442 = sbr.rel (%p440) target = $region60
        $region59: #{gpt_forward.1} parent=11 // pred_region
          _
        $region60: #{gpt_forward.1} parent=11 // pred_fallthru
          _
        // Predicated region
        $region61: #{gpt_forward.1} parent=11 // pred_check
          %p443 = pneg %p324
        $region62: #{gpt_forward.1} parent=11 // pred_check_branch
          %445 = sbr.rel (%p443) target = $region64
        $region63: #{gpt_forward.1} parent=11 // pred_region
          _
        $region64: #{gpt_forward.1} parent=11 // pred_fallthru
          _
        // Predicated region
        $region65: #{gpt_forward.1} parent=11 // pred_check
          %p446 = pneg %p345
        $region66: #{gpt_forward.1} parent=11 // pred_check_branch
          %448 = sbr.rel (%p446) target = $region68
        $region67: #{gpt_forward.1} parent=11 // pred_region
          _
        $region68: #{gpt_forward.1} parent=11 // pred_fallthru
          _
        // Predicated region
        $region69: #{gpt_forward.1} parent=11 // pred_check
          %p449 = pneg %p366
        $region70: #{gpt_forward.1} parent=11 // pred_check_branch
          %451 = sbr.rel (%p449) target = $region72
        $region71: #{gpt_forward.1} parent=11 // pred_region
          _
        $region72: #{gpt_forward.1} parent=11 // pred_fallthru
          _
      $region12: #{gpt_forward.1} parent=5 // pred_fallthru
        _
      %p452 = scmp.lt.s32.totalorder %s25, 2
      // Predicated region
      $region73: #{gpt_forward.1} parent=5 // pred_check
        %p453 = pneg %p452
      $region74: #{gpt_forward.1} parent=5 // pred_check_branch
        %455 = sbr.rel (%p453) target = $region76
      $region75: #{gpt_forward.1} parent=5 // pred_region
        // Predicated region
        $region77: #{gpt_forward.1} parent=75 // pred_check
          %p456 = pneg %p45
        $region78: #{gpt_forward.1} parent=75 // pred_check_branch
          %458 = sbr.rel (%p456) target = $region80
        $region79: #{gpt_forward.1} parent=75 // pred_region
          %p459 = scmp.lt.s32.totalorder %s25, 1
          %s460 = scalar_select %p459, %s25, 1
          %s461 = smul.addr %s460, 8
          %s462 = scalar_lea.vmem %s0, %s461
        $region80: #{gpt_forward.1} parent=75 // pred_fallthru
          _
      $region76: #{gpt_forward.1} parent=5 // pred_fallthru
        _
      %p463 = scmp.le.s32.totalorder 1, %s25
      %p464 = scmp.lt.s32.totalorder %s25, 3
      %p465 = pnand %p463, %p464
      %p466 = pneg %p465
      // Predicated region
      $region81: #{gpt_forward.1} parent=5 // pred_check
        _
      $region82: #{gpt_forward.1} parent=5 // pred_check_branch
        %468 = sbr.rel (%p465) target = $region84
      $region83: #{gpt_forward.1} parent=5 // pred_region
        %s469 = ssub.s32 %s25, 1
        %p470 = scmp.lt.s32.totalorder %s30, 1
        %s471 = scalar_select %p470, %s30, 1
        %s472 = smul.addr %s471, 8
        %s473 = scalar_lea.vmem %s0, %s472
        %p474 = pneg %p51
        %p475 = pneg %p48
        %p476 = pneg %p72
        %p477 = pneg %p69
        %p478 = pneg %p93
        %p479 = pneg %p90
        %p480 = pneg %p114
        %p481 = pneg %p111
        %p482 = pneg %p135
        %p483 = pneg %p132
        %p484 = pneg %p156
        %p485 = pneg %p153
        %p486 = pneg %p177
        %p487 = pneg %p174
        %p488 = pneg %p198
        %p489 = pneg %p195
        %p490 = pneg %p219
        %p491 = pneg %p216
        %p492 = pneg %p240
        %p493 = pneg %p237
        %p494 = pneg %p261
        %p495 = pneg %p258
        %p496 = pneg %p282
        %p497 = pneg %p279
        %p498 = pneg %p303
        %p499 = pneg %p300
        %p500 = pneg %p324
        %p501 = pneg %p321
        %p502 = pneg %p345
        %p503 = pneg %p342
        %p504 = pneg %p366
        %p505 = pneg %p363
        %p506 = pneg %p392
        %p507 = pneg %p389
        %s508 = sand.u32 %s379, 1
        %s509 = scalar_lea.sflag [#allocation3], %s508
        %s510 = sand.u32 %s379, 1
        %s511 = smul.addr %s510, 8
        %s512 = scalar_lea.vmem [#allocation2], %s511
        %p513 = scmp.lt.s32.totalorder %s30, 1
        %s514 = scalar_select %p513, %s30, 1
        %s515 = smul.addr %s514, 8
        %s516 = scalar_lea.vmem %s0, %s515
        %v517 = vld [vmem:[%s516] sm:$0xff]
        %v518 = vlaneseq
        %v519 = vshrl.u32 %v518, 7
        %v520 = vlaneseq
        %v521 = vand.u32 %v520, 127
        %vm522 = vcmp.le.s32.totalorder %v521, %v519
        %v523 = vsel %vm522, 0.0, -1e+30
        %v524 = vld [vmem:[%s1] sm:$0x1]
        %v525 = vld [vmem:[%s2] sm:$0x1]
        %vm526 = vcmask 261120
        %v527 = vsel %vm526, %v517, 0.0
        %528 = vadd.xlane.f32.xlu0 %v527
        %v529 = vpop.xlane.xlu0 %528
        %v530 = vrcp.pop 32.0
        %v531 = vmul.f32 32.0, %v530
        %v532 = vsub.f32 1.0, %v531
        %v533 = vmul.f32 %v530, %v532
        %v534 = vadd.f32 %v530, %v533
        %vm535 = vweird.f32 %v530
        %v536 = vsel %vm535, %v530, %v534
        %v537 = vmul.f32 %v529, %v536
        %v538 = vsub.f32 %v517, %v537
        %v539 = vmul.f32 %v538, %v538
        %v540 = vsel %vm526, %v539, 0.0
        %541 = vadd.xlane.f32.xlu0 %v540
        %v542 = vpop.xlane.xlu0 %541
        %v543 = vmul.f32 %v542, %v536
        %v544 = vadd.f32 %v543, 1e-05
        %v545 = vrsqrt.pop %v544
        %v546 = vmul.f32 %v545, %v544
        %v547 = vmul.f32 %v546, %v545
        %v548 = vmul.f32 0.5, %v547
        %v549 = vsub.f32 1.5, %v548
        %v550 = vmul.f32 %v545, %v549
        %vm551 = vweird.f32 %v544
        %vm552 = vweird.f32 %v545
        %vm553 = vmor %vm551, %vm552
        %v554 = vsel %vm553, %v545, %v550
        %v555 = vmul.f32 %v538, %v554
        %v557 = vperm.slane %v524, 0
        %v559 = vmul.f32 %v555, %v557
        %v561 = vperm.slane %v525, 0
        %v563 = vadd.f32 %v559, %v561
        %v564 = vld [vmem:[%s3] sm:$0xff]
        %v565 = vld [vmem:[%s3 + $0x8] sm:$0xff]
        %v566 = vld [vmem:[%s3 + $0x10] sm:$0xff]
        %v567 = vld [vmem:[%s3 + $0x18] sm:$0xff]
        %v569 = vsel %vm526, %v563, 0
        %571 = vmatpush.msra.mxu0 0.0
        %572 = vmatpush.msra.mxu0 0.0
        %573 = vmatpush.msra.mxu0 0.0
        %574 = vmatpush.msra.mxu0 0.0
        %575 = vmatpush.msra.mxu0 0.0
        %576 = vmatpush.msra.mxu0 0.0
        %577 = vmatpush.msra.mxu0 0.0
        %578 = vmatpush.msra.mxu0 0.0
        %579 = vmatpush.msra.mxu0 0.0
        %580 = vmatpush.msra.mxu0 0.0
        %581 = vmatpush.msra.mxu0 0.0
        %582 = vmatpush.msra.mxu0 0.0
        %583 = vmatpush.msra.mxu0 %v567
        %584 = vmatpush.msra.mxu0 %v566
        %585 = vmatpush.msra.mxu0 %v565
        %586 = vmatpush.msra.mxu0 %v564
        %587 = vmatmul.f32.gmra.mxu0 %v569
        %v588 = vpop.f32.mrf.mxu0
        %v589 = vadd.f32 0.0, %v588
        %590 = vdwg.mxu0
        %592 = vrot.lane.b32.xlu0 %v589, 96
        %v593 = vpop.permute.xlu0 %592
        %vm594 = vcmask 64512
        %v595 = vsel %vm594, %v589, 0
        %v597 = vsel %vm594, %v593, 0
        %599 = vmatpush.xpose.msra.mxu0 0.0
        %600 = vmatpush.xpose.msra.mxu0 0.0
        %601 = vmatpush.xpose.msra.mxu0 0.0
        %602 = vmatpush.xpose.msra.mxu0 0.0
        %603 = vmatpush.xpose.msra.mxu0 0.0
        %604 = vmatpush.xpose.msra.mxu0 0.0
        %605 = vmatpush.xpose.msra.mxu0 0.0
        %606 = vmatpush.xpose.msra.mxu0 0.0
        %607 = vmatpush.xpose.msra.mxu0 0.0
        %608 = vmatpush.xpose.msra.mxu0 0.0
        %609 = vmatpush.xpose.msra.mxu0 0.0
        %610 = vmatpush.xpose.msra.mxu0 0.0
        %611 = vmatpush.xpose.msra.mxu0 0.0
        %612 = vmatpush.xpose.msra.mxu0 0.0
        %613 = vmatpush.xpose.msra.mxu0 0.0
        %614 = vmatpush.xpose.msra.mxu0 %v597
        %615 = vmatmul.f32.gmra.mxu0 %v595
        %v616 = vpop.f32.mrf.mxu0
        %v617 = vadd.f32 0.0, %v616
        %618 = vdwg.mxu0
        %v619 = vmul.f32 %v617, 0.17677669
        %v620 = vadd.f32 %v619, %v523
        %v621 = vsel %vm594, %v620, -inf
        %622 = vmax.xlane.f32.xlu0 %v621
        %v623 = vpop.xlane.xlu0 %622
        %v624 = vsub.f32 %v620, %v623
        %v625 = vmul.f32 %v624, 1.442695
        %v626 = vpow.pop %v625
        %v627 = vsel %vm594, %v626, 0.0
        %628 = vadd.xlane.f32.xlu0 %v627
        %v629 = vpop.xlane.xlu0 %628
        %v630 = vrcp.pop %v629
        %v631 = vmul.f32 %v626, %v630
        %632 = vrot.lane.b32.xlu0 %v589, 64
        %v633 = vpop.permute.xlu0 %632
        %v636 = vsel %vm594, %v631, 0
        %638 = vmatpush.msra.mxu0 0.0
        %639 = vmatpush.msra.mxu0 0.0
        %640 = vmatpush.msra.mxu0 0.0
        %641 = vmatpush.msra.mxu0 0.0
        %642 = vmatpush.msra.mxu0 0.0
        %643 = vmatpush.msra.mxu0 0.0
        %644 = vmatpush.msra.mxu0 0.0
        %645 = vmatpush.msra.mxu0 0.0
        %646 = vmatpush.msra.mxu0 0.0
        %647 = vmatpush.msra.mxu0 0.0
        %648 = vmatpush.msra.mxu0 0.0
        %649 = vmatpush.msra.mxu0 0.0
        %650 = vmatpush.msra.mxu0 0.0
        %651 = vmatpush.msra.mxu0 0.0
        %652 = vmatpush.msra.mxu0 0.0
        %653 = vmatpush.msra.mxu0 %v633
        %654 = vmatmul.f32.gmra.mxu0 %v636
        %v655 = vpop.f32.mrf.mxu0
        %v656 = vadd.f32 0.0, %v655
        %657 = vdwg.mxu0
        %658 = vrot.lane.b32.xlu0 %v589, 120
        %v659 = vpop.permute.xlu0 %658
        %660 = vrot.lane.b32.xlu0 %v589, 88
        %v661 = vpop.permute.xlu0 %660
        %v662 = vsel %vm594, %v659, 0
        %v664 = vsel %vm594, %v661, 0
        %666 = vmatpush.xpose.msra.mxu0 0.0
        %667 = vmatpush.xpose.msra.mxu0 0.0
        %668 = vmatpush.xpose.msra.mxu0 0.0
        %669 = vmatpush.xpose.msra.mxu0 0.0
        %670 = vmatpush.xpose.msra.mxu0 0.0
        %671 = vmatpush.xpose.msra.mxu0 0.0
        %672 = vmatpush.xpose.msra.mxu0 0.0
        %673 = vmatpush.xpose.msra.mxu0 0.0
        %674 = vmatpush.xpose.msra.mxu0 0.0
        %675 = vmatpush.xpose.msra.mxu0 0.0
        %676 = vmatpush.xpose.msra.mxu0 0.0
        %677 = vmatpush.xpose.msra.mxu0 0.0
        %678 = vmatpush.xpose.msra.mxu0 0.0
        %679 = vmatpush.xpose.msra.mxu0 0.0
        %680 = vmatpush.xpose.msra.mxu0 0.0
        %681 = vmatpush.xpose.msra.mxu0 %v664
        %682 = vmatmul.f32.gmra.mxu0 %v662
        %v683 = vpop.f32.mrf.mxu0
        %v684 = vadd.f32 0.0, %v683
        %685 = vdwg.mxu0
        %v686 = vmul.f32 %v684, 0.17677669
        %v687 = vadd.f32 %v686, %v523
        %v688 = vsel %vm594, %v687, -inf
        %689 = vmax.xlane.f32.xlu0 %v688
        %v690 = vpop.xlane.xlu0 %689
        %v691 = vsub.f32 %v687, %v690
        %v692 = vmul.f32 %v691, 1.442695
        %v693 = vpow.pop %v692
        %v694 = vsel %vm594, %v693, 0.0
        %695 = vadd.xlane.f32.xlu0 %v694
        %v696 = vpop.xlane.xlu0 %695
        %v697 = vrcp.pop %v696
        %v698 = vmul.f32 %v693, %v697
        %699 = vrot.lane.b32.xlu0 %v589, 56
        %v700 = vpop.permute.xlu0 %699
        %v703 = vsel %vm594, %v698, 0
        %705 = vmatpush.msra.mxu0 0.0
        %706 = vmatpush.msra.mxu0 0.0
        %707 = vmatpush.msra.mxu0 0.0
        %708 = vmatpush.msra.mxu0 0.0
        %709 = vmatpush.msra.mxu0 0.0
        %710 = vmatpush.msra.mxu0 0.0
        %711 = vmatpush.msra.mxu0 0.0
        %712 = vmatpush.msra.mxu0 0.0
        %713 = vmatpush.msra.mxu0 0.0
        %714 = vmatpush.msra.mxu0 0.0
        %715 = vmatpush.msra.mxu0 0.0
        %716 = vmatpush.msra.mxu0 0.0
        %717 = vmatpush.msra.mxu0 0.0
        %718 = vmatpush.msra.mxu0 0.0
        %719 = vmatpush.msra.mxu0 0.0
        %720 = vmatpush.msra.mxu0 %v700
        %721 = vmatmul.f32.gmra.mxu0 %v703
        %v722 = vpop.f32.mrf.mxu0
        %v723 = vadd.f32 0.0, %v722
        %724 = vdwg.mxu0
        %725 = vrot.lane.b32.xlu0 %v589, 112
        %v726 = vpop.permute.xlu0 %725
        %727 = vrot.lane.b32.xlu0 %v589, 80
        %v728 = vpop.permute.xlu0 %727
        %v729 = vsel %vm594, %v726, 0
        %v731 = vsel %vm594, %v728, 0
        %733 = vmatpush.xpose.msra.mxu0 0.0
        %734 = vmatpush.xpose.msra.mxu0 0.0
        %735 = vmatpush.xpose.msra.mxu0 0.0
        %736 = vmatpush.xpose.msra.mxu0 0.0
        %737 = vmatpush.xpose.msra.mxu0 0.0
        %738 = vmatpush.xpose.msra.mxu0 0.0
        %739 = vmatpush.xpose.msra.mxu0 0.0
        %740 = vmatpush.xpose.msra.mxu0 0.0
        %741 = vmatpush.xpose.msra.mxu0 0.0
        %742 = vmatpush.xpose.msra.mxu0 0.0
        %743 = vmatpush.xpose.msra.mxu0 0.0
        %744 = vmatpush.xpose.msra.mxu0 0.0
        %745 = vmatpush.xpose.msra.mxu0 0.0
        %746 = vmatpush.xpose.msra.mxu0 0.0
        %747 = vmatpush.xpose.msra.mxu0 0.0
        %748 = vmatpush.xpose.msra.mxu0 %v731
        %749 = vmatmul.f32.gmra.mxu0 %v729
        %v750 = vpop.f32.mrf.mxu0
        %v751 = vadd.f32 0.0, %v750
        %752 = vdwg.mxu0
        %v753 = vmul.f32 %v751, 0.17677669
        %v754 = vadd.f32 %v753, %v523
        %v755 = vsel %vm594, %v754, -inf
        %756 = vmax.xlane.f32.xlu0 %v755
        %v757 = vpop.xlane.xlu0 %756
        %v758 = vsub.f32 %v754, %v757
        %v759 = vmul.f32 %v758, 1.442695
        %v760 = vpow.pop %v759
        %v761 = vsel %vm594, %v760, 0.0
        %762 = vadd.xlane.f32.xlu0 %v761
        %v763 = vpop.xlane.xlu0 %762
        %v764 = vrcp.pop %v763
        %v765 = vmul.f32 %v760, %v764
        %766 = vrot.lane.b32.xlu0 %v589, 48
        %v767 = vpop.permute.xlu0 %766
        %v770 = vsel %vm594, %v765, 0
        %772 = vmatpush.msra.mxu0 0.0
        %773 = vmatpush.msra.mxu0 0.0
        %774 = vmatpush.msra.mxu0 0.0
        %775 = vmatpush.msra.mxu0 0.0
        %776 = vmatpush.msra.mxu0 0.0
        %777 = vmatpush.msra.mxu0 0.0
        %778 = vmatpush.msra.mxu0 0.0
        %779 = vmatpush.msra.mxu0 0.0
        %780 = vmatpush.msra.mxu0 0.0
        %781 = vmatpush.msra.mxu0 0.0
        %782 = vmatpush.msra.mxu0 0.0
        %783 = vmatpush.msra.mxu0 0.0
        %784 = vmatpush.msra.mxu0 0.0
        %785 = vmatpush.msra.mxu0 0.0
        %786 = vmatpush.msra.mxu0 0.0
        %787 = vmatpush.msra.mxu0 %v767
        %788 = vmatmul.f32.gmra.mxu0 %v770
        %v789 = vpop.f32.mrf.mxu0
        %v790 = vadd.f32 0.0, %v789
        %791 = vdwg.mxu0
        %792 = vrot.lane.b32.xlu0 %v589, 104
        %v793 = vpop.permute.xlu0 %792
        %794 = vrot.lane.b32.xlu0 %v589, 72
        %v795 = vpop.permute.xlu0 %794
        %v796 = vsel %vm594, %v793, 0
        %v798 = vsel %vm594, %v795, 0
        %800 = vmatpush.xpose.msra.mxu0 0.0
        %801 = vmatpush.xpose.msra.mxu0 0.0
        %802 = vmatpush.xpose.msra.mxu0 0.0
        %803 = vmatpush.xpose.msra.mxu0 0.0
        %804 = vmatpush.xpose.msra.mxu0 0.0
        %805 = vmatpush.xpose.msra.mxu0 0.0
        %806 = vmatpush.xpose.msra.mxu0 0.0
        %807 = vmatpush.xpose.msra.mxu0 0.0
        %808 = vmatpush.xpose.msra.mxu0 0.0
        %809 = vmatpush.xpose.msra.mxu0 0.0
        %810 = vmatpush.xpose.msra.mxu0 0.0
        %811 = vmatpush.xpose.msra.mxu0 0.0
        %812 = vmatpush.xpose.msra.mxu0 0.0
        %813 = vmatpush.xpose.msra.mxu0 0.0
        %814 = vmatpush.xpose.msra.mxu0 0.0
        %815 = vmatpush.xpose.msra.mxu0 %v798
        %816 = vmatmul.f32.gmra.mxu0 %v796
        %v817 = vpop.f32.mrf.mxu0
        %v818 = vadd.f32 0.0, %v817
        %819 = vdwg.mxu0
        %v820 = vmul.f32 %v818, 0.17677669
        %v821 = vadd.f32 %v820, %v523
        %v822 = vsel %vm594, %v821, -inf
        %823 = vmax.xlane.f32.xlu0 %v822
        %v824 = vpop.xlane.xlu0 %823
        %v825 = vsub.f32 %v821, %v824
        %v826 = vmul.f32 %v825, 1.442695
        %v827 = vpow.pop %v826
        %v828 = vsel %vm594, %v827, 0.0
        %829 = vadd.xlane.f32.xlu0 %v828
        %v830 = vpop.xlane.xlu0 %829
        %v831 = vrcp.pop %v830
        %v832 = vmul.f32 %v827, %v831
        %833 = vrot.lane.b32.xlu0 %v589, 40
        %v834 = vpop.permute.xlu0 %833
        %v837 = vsel %vm594, %v832, 0
        %839 = vmatpush.msra.mxu0 0.0
        %840 = vmatpush.msra.mxu0 0.0
        %841 = vmatpush.msra.mxu0 0.0
        %842 = vmatpush.msra.mxu0 0.0
        %843 = vmatpush.msra.mxu0 0.0
        %844 = vmatpush.msra.mxu0 0.0
        %845 = vmatpush.msra.mxu0 0.0
        %846 = vmatpush.msra.mxu0 0.0
        %847 = vmatpush.msra.mxu0 0.0
        %848 = vmatpush.msra.mxu0 0.0
        %849 = vmatpush.msra.mxu0 0.0
        %850 = vmatpush.msra.mxu0 0.0
        %851 = vmatpush.msra.mxu0 0.0
        %852 = vmatpush.msra.mxu0 0.0
        %853 = vmatpush.msra.mxu0 0.0
        %854 = vmatpush.msra.mxu0 %v834
        %855 = vmatmul.f32.gmra.mxu0 %v837
        %v856 = vpop.f32.mrf.mxu0
        %v857 = vadd.f32 0.0, %v856
        %858 = vdwg.mxu0
        %860 = vrot.lane.b32.xlu0 %v723, 8
        %v861 = vpop.permute.xlu0 %860
        %864 = vrot.lane.b32.xlu0 %v790, 16
        %v865 = vpop.permute.xlu0 %864
        %868 = vrot.lane.b32.xlu0 %v857, 24
        %v869 = vpop.permute.xlu0 %868
        %v871 = vsel %vm594, %v656, %v861
        %vm872 = vcmask 130048
        %v873 = vsel %vm872, %v871, %v865
        %vm874 = vcmask 195584
        %v875 = vsel %vm874, %v873, %v869
        %v876 = vld [vmem:[%s4] sm:$0xff]
        %v877 = vld [vmem:[%s4 + $0x8] sm:$0xff]
        %v878 = vld [vmem:[%s4 + $0x10] sm:$0xff]
        %v879 = vld [vmem:[%s4 + $0x18] sm:$0xff]
        %v880 = vld [vmem:[%s5] sm:$0x1]
        %v882 = vperm.slane %v880, 0
        %v885 = vsel %vm526, %v875, 0
        %887 = vmatpush.msra.mxu0 0.0
        %888 = vmatpush.msra.mxu0 0.0
        %889 = vmatpush.msra.mxu0 0.0
        %890 = vmatpush.msra.mxu0 0.0
        %891 = vmatpush.msra.mxu0 0.0
        %892 = vmatpush.msra.mxu0 0.0
        %893 = vmatpush.msra.mxu0 0.0
        %894 = vmatpush.msra.mxu0 0.0
        %895 = vmatpush.msra.mxu0 0.0
        %896 = vmatpush.msra.mxu0 0.0
        %897 = vmatpush.msra.mxu0 0.0
        %898 = vmatpush.msra.mxu0 0.0
        %899 = vmatpush.msra.mxu0 %v879
        %900 = vmatpush.msra.mxu0 %v878
        %901 = vmatpush.msra.mxu0 %v877
        %902 = vmatpush.msra.mxu0 %v876
        %903 = vmatmul.f32.gmra.mxu0 %v885
        %v904 = vpop.f32.mrf.mxu0
        %v905 = vadd.f32 %v882, %v904
        %906 = vdwg.mxu0
        %v907 = vadd.f32 %v517, %v905
        %v908 = vld [vmem:[%s6] sm:$0x1]
        %v909 = vld [vmem:[%s7] sm:$0x1]
        %v910 = vsel %vm526, %v907, 0.0
        %911 = vadd.xlane.f32.xlu0 %v910
        %v912 = vpop.xlane.xlu0 %911
        %v913 = vmul.f32 %v912, %v536
        %v914 = vsub.f32 %v907, %v913
        %v915 = vmul.f32 %v914, %v914
        %v916 = vsel %vm526, %v915, 0.0
        %917 = vadd.xlane.f32.xlu0 %v916
        %v918 = vpop.xlane.xlu0 %917
        %v919 = vmul.f32 %v918, %v536
        %v920 = vadd.f32 %v919, 1e-05
        %v921 = vrsqrt.pop %v920
        %v922 = vmul.f32 %v921, %v920
        %v923 = vmul.f32 %v922, %v921
        %v924 = vmul.f32 0.5, %v923
        %v925 = vsub.f32 1.5, %v924
        %v926 = vmul.f32 %v921, %v925
        %vm927 = vweird.f32 %v920
        %vm928 = vweird.f32 %v921
        %vm929 = vmor %vm927, %vm928
        %v930 = vsel %vm929, %v921, %v926
        %v931 = vmul.f32 %v914, %v930
        %v933 = vperm.slane %v908, 0
        %v935 = vmul.f32 %v931, %v933
        %v937 = vperm.slane %v909, 0
        %v939 = vadd.f32 %v935, %v937
        %v940 = vld [vmem:[%s8] sm:$0xff]
        %v941 = vld [vmem:[%s8 + $0x8] sm:$0xff]
        %v942 = vld [vmem:[%s8 + $0x10] sm:$0xff]
        %v943 = vld [vmem:[%s8 + $0x18] sm:$0xff]
        %v944 = vld [vmem:[%s9] sm:$0x1]
        %v946 = vperm.slane %v944, 0
        %v949 = vsel %vm526, %v939, 0
        %951 = vmatpush.msra.mxu0 0.0
        %952 = vmatpush.msra.mxu0 0.0
        %953 = vmatpush.msra.mxu0 0.0
        %954 = vmatpush.msra.mxu0 0.0
        %955 = vmatpush.msra.mxu0 0.0
        %956 = vmatpush.msra.mxu0 0.0
        %957 = vmatpush.msra.mxu0 0.0
        %958 = vmatpush.msra.mxu0 0.0
        %959 = vmatpush.msra.mxu0 0.0
        %960 = vmatpush.msra.mxu0 0.0
        %961 = vmatpush.msra.mxu0 0.0
        %962 = vmatpush.msra.mxu0 0.0
        %963 = vmatpush.msra.mxu0 %v943
        %964 = vmatpush.msra.mxu0 %v942
        %965 = vmatpush.msra.mxu0 %v941
        %966 = vmatpush.msra.mxu0 %v940
        %967 = vmatmul.f32.gmra.mxu0 %v949
        %v968 = vpop.f32.mrf.mxu0
        %v969 = vadd.f32 %v946, %v968
        %970 = vdwg.mxu0
        %v971 = vmax.f32 %v969, 0.0
        %v972 = vld [vmem:[%s10] sm:$0xff]
        %v973 = vld [vmem:[%s10 + $0x8] sm:$0xff]
        %v974 = vld [vmem:[%s10 + $0x10] sm:$0xff]
        %v975 = vld [vmem:[%s10 + $0x18] sm:$0xff]
        %v976 = vld [vmem:[%s10 + $0x20] sm:$0xff]
        %v977 = vld [vmem:[%s10 + $0x28] sm:$0xff]
        %v978 = vld [vmem:[%s10 + $0x30] sm:$0xff]
        %v979 = vld [vmem:[%s10 + $0x38] sm:$0xff]
        %v980 = vld [vmem:[%s10 + $0x40] sm:$0xff]
        %v981 = vld [vmem:[%s10 + $0x48] sm:$0xff]
        %v982 = vld [vmem:[%s10 + $0x50] sm:$0xff]
        %v983 = vld [vmem:[%s10 + $0x58] sm:$0xff]
        %v984 = vld [vmem:[%s10 + $0x60] sm:$0xff]
        %v985 = vld [vmem:[%s10 + $0x68] sm:$0xff]
        %v986 = vld [vmem:[%s10 + $0x70] sm:$0xff]
        %v987 = vld [vmem:[%s10 + $0x78] sm:$0xff]
        %v988 = vld [vmem:[%s11] sm:$0x1]
        %v990 = vperm.slane %v988, 0
        %992 = vmatpush.msra.mxu0 %v987
        %993 = vmatpush.msra.mxu0 %v986
        %994 = vmatpush.msra.mxu0 %v985
        %995 = vmatpush.msra.mxu0 %v984
        %996 = vmatpush.msra.mxu0 %v983
        %997 = vmatpush.msra.mxu0 %v982
        %998 = vmatpush.msra.mxu0 %v981
        %999 = vmatpush.msra.mxu0 %v980
        %1000 = vmatpush.msra.mxu0 %v979
        %1001 = vmatpush.msra.mxu0 %v978
        %1002 = vmatpush.msra.mxu0 %v977
        %1003 = vmatpush.msra.mxu0 %v976
        %1004 = vmatpush.msra.mxu0 %v975
        %1005 = vmatpush.msra.mxu0 %v974
        %1006 = vmatpush.msra.mxu0 %v973
        %1007 = vmatpush.msra.mxu0 %v972
        %1008 = vmatmul.f32.gmra.mxu0 %v971
        %v1009 = vpop.f32.mrf.mxu0
        %v1010 = vadd.f32 %v990, %v1009
        %1011 = vdwg.mxu0
        %v1012 = vadd.f32 %v907, %v1010
        %s1013 = scalar_lea.vmem %s1, 1
        %v1014 = vld [vmem:[%s1013] sm:$0x1]
        %s1015 = scalar_lea.vmem %s2, 1
        %v1016 = vld [vmem:[%s1015] sm:$0x1]
        %v1017 = vsel %vm526, %v1012, 0.0
        %1018 = vadd.xlane.f32.xlu0 %v1017
        %v1019 = vpop.xlane.xlu0 %1018
        %v1020 = vmul.f32 %v1019, %v536
        %v1021 = vsub.f32 %v1012, %v1020
        %v1022 = vmul.f32 %v1021, %v1021
        %v1023 = vsel %vm526, %v1022, 0.0
        %1024 = vadd.xlane.f32.xlu0 %v1023
        %v1025 = vpop.xlane.xlu0 %1024
        %v1026 = vmul.f32 %v1025, %v536
        %v1027 = vadd.f32 %v1026, 1e-05
        %v1028 = vrsqrt.pop %v1027
        %v1029 = vmul.f32 %v1028, %v1027
        %v1030 = vmul.f32 %v1029, %v1028
        %v1031 = vmul.f32 0.5, %v1030
        %v1032 = vsub.f32 1.5, %v1031
        %v1033 = vmul.f32 %v1028, %v1032
        %vm1034 = vweird.f32 %v1027
        %vm1035 = vweird.f32 %v1028
        %vm1036 = vmor %vm1034, %vm1035
        %v1037 = vsel %vm1036, %v1028, %v1033
        %v1038 = vmul.f32 %v1021, %v1037
        %v1040 = vperm.slane %v1014, 0
        %v1042 = vmul.f32 %v1038, %v1040
        %v1044 = vperm.slane %v1016, 0
        %v1046 = vadd.f32 %v1042, %v1044
        %s1047 = scalar_lea.vmem %s3, 32
        %v1048 = vld [vmem:[%s1047] sm:$0xff]
        %v1049 = vld [vmem:[%s1047 + $0x8] sm:$0xff]
        %v1050 = vld [vmem:[%s1047 + $0x10] sm:$0xff]
        %v1051 = vld [vmem:[%s1047 + $0x18] sm:$0xff]
        %v1053 = vsel %vm526, %v1046, 0
        %1055 = vmatpush.msra.mxu0 0.0
        %1056 = vmatpush.msra.mxu0 0.0
        %1057 = vmatpush.msra.mxu0 0.0
        %1058 = vmatpush.msra.mxu0 0.0
        %1059 = vmatpush.msra.mxu0 0.0
        %1060 = vmatpush.msra.mxu0 0.0
        %1061 = vmatpush.msra.mxu0 0.0
        %1062 = vmatpush.msra.mxu0 0.0
        %1063 = vmatpush.msra.mxu0 0.0
        %1064 = vmatpush.msra.mxu0 0.0
        %1065 = vmatpush.msra.mxu0 0.0
        %1066 = vmatpush.msra.mxu0 0.0
        %1067 = vmatpush.msra.mxu0 %v1051
        %1068 = vmatpush.msra.mxu0 %v1050
        %1069 = vmatpush.msra.mxu0 %v1049
        %1070 = vmatpush.msra.mxu0 %v1048
        %1071 = vmatmul.f32.gmra.mxu0 %v1053
        %v1072 = vpop.f32.mrf.mxu0
        %v1073 = vadd.f32 0.0, %v1072
        %1074 = vdwg.mxu0
        %1076 = vrot.lane.b32.xlu0 %v1073, 96
        %v1077 = vpop.permute.xlu0 %1076
        %v1078 = vsel %vm594, %v1073, 0
        %v1080 = vsel %vm594, %v1077, 0
        %1082 = vmatpush.xpose.msra.mxu0 0.0
        %1083 = vmatpush.xpose.msra.mxu0 0.0
        %1084 = vmatpush.xpose.msra.mxu0 0.0
        %1085 = vmatpush.xpose.msra.mxu0 0.0
        %1086 = vmatpush.xpose.msra.mxu0 0.0
        %1087 = vmatpush.xpose.msra.mxu0 0.0
        %1088 = vmatpush.xpose.msra.mxu0 0.0
        %1089 = vmatpush.xpose.msra.mxu0 0.0
        %1090 = vmatpush.xpose.msra.mxu0 0.0
        %1091 = vmatpush.xpose.msra.mxu0 0.0
        %1092 = vmatpush.xpose.msra.mxu0 0.0
        %1093 = vmatpush.xpose.msra.mxu0 0.0
        %1094 = vmatpush.xpose.msra.mxu0 0.0
        %1095 = vmatpush.xpose.msra.mxu0 0.0
        %1096 = vmatpush.xpose.msra.mxu0 0.0
        %1097 = vmatpush.xpose.msra.mxu0 %v1080
        %1098 = vmatmul.f32.gmra.mxu0 %v1078
        %v1099 = vpop.f32.mrf.mxu0
        %v1100 = vadd.f32 0.0, %v1099
        %1101 = vdwg.mxu0
        %v1102 = vmul.f32 %v1100, 0.17677669
        %v1103 = vadd.f32 %v1102, %v523
        %v1104 = vsel %vm594, %v1103, -inf
        %1105 = vmax.xlane.f32.xlu0 %v1104
        %v1106 = vpop.xlane.xlu0 %1105
        %v1107 = vsub.f32 %v1103, %v1106
        %v1108 = vmul.f32 %v1107, 1.442695
        %v1109 = vpow.pop %v1108
        %v1110 = vsel %vm594, %v1109, 0.0
        %1111 = vadd.xlane.f32.xlu0 %v1110
        %v1112 = vpop.xlane.xlu0 %1111
        %v1113 = vrcp.pop %v1112
        %v1114 = vmul.f32 %v1109, %v1113
        %1115 = vrot.lane.b32.xlu0 %v1073, 64
        %v1116 = vpop.permute.xlu0 %1115
        %v1119 = vsel %vm594, %v1114, 0
        %1121 = vmatpush.msra.mxu0 0.0
        %1122 = vmatpush.msra.mxu0 0.0
        %1123 = vmatpush.msra.mxu0 0.0
        %1124 = vmatpush.msra.mxu0 0.0
        %1125 = vmatpush.msra.mxu0 0.0
        %1126 = vmatpush.msra.mxu0 0.0
        %1127 = vmatpush.msra.mxu0 0.0
        %1128 = vmatpush.msra.mxu0 0.0
        %1129 = vmatpush.msra.mxu0 0.0
        %1130 = vmatpush.msra.mxu0 0.0
        %1131 = vmatpush.msra.mxu0 0.0
        %1132 = vmatpush.msra.mxu0 0.0
        %1133 = vmatpush.msra.mxu0 0.0
        %1134 = vmatpush.msra.mxu0 0.0
        %1135 = vmatpush.msra.mxu0 0.0
        %1136 = vmatpush.msra.mxu0 %v1116
        %1137 = vmatmul.f32.gmra.mxu0 %v1119
        %v1138 = vpop.f32.mrf.mxu0
        %v1139 = vadd.f32 0.0, %v1138
        %1140 = vdwg.mxu0
        %1141 = vrot.lane.b32.xlu0 %v1073, 120
        %v1142 = vpop.permute.xlu0 %1141
        %1143 = vrot.lane.b32.xlu0 %v1073, 88
        %v1144 = vpop.permute.xlu0 %1143
        %v1145 = vsel %vm594, %v1142, 0
        %v1147 = vsel %vm594, %v1144, 0
        %1149 = vmatpush.xpose.msra.mxu0 0.0
        %1150 = vmatpush.xpose.msra.mxu0 0.0
        %1151 = vmatpush.xpose.msra.mxu0 0.0
        %1152 = vmatpush.xpose.msra.mxu0 0.0
        %1153 = vmatpush.xpose.msra.mxu0 0.0
        %1154 = vmatpush.xpose.msra.mxu0 0.0
        %1155 = vmatpush.xpose.msra.mxu0 0.0
        %1156 = vmatpush.xpose.msra.mxu0 0.0
        %1157 = vmatpush.xpose.msra.mxu0 0.0
        %1158 = vmatpush.xpose.msra.mxu0 0.0
        %1159 = vmatpush.xpose.msra.mxu0 0.0
        %1160 = vmatpush.xpose.msra.mxu0 0.0
        %1161 = vmatpush.xpose.msra.mxu0 0.0
        %1162 = vmatpush.xpose.msra.mxu0 0.0
        %1163 = vmatpush.xpose.msra.mxu0 0.0
        %1164 = vmatpush.xpose.msra.mxu0 %v1147
        %1165 = vmatmul.f32.gmra.mxu0 %v1145
        %v1166 = vpop.f32.mrf.mxu0
        %v1167 = vadd.f32 0.0, %v1166
        %1168 = vdwg.mxu0
        %v1169 = vmul.f32 %v1167, 0.17677669
        %v1170 = vadd.f32 %v1169, %v523
        %v1171 = vsel %vm594, %v1170, -inf
        %1172 = vmax.xlane.f32.xlu0 %v1171
        %v1173 = vpop.xlane.xlu0 %1172
        %v1174 = vsub.f32 %v1170, %v1173
        %v1175 = vmul.f32 %v1174, 1.442695
        %v1176 = vpow.pop %v1175
        %v1177 = vsel %vm594, %v1176, 0.0
        %1178 = vadd.xlane.f32.xlu0 %v1177
        %v1179 = vpop.xlane.xlu0 %1178
        %v1180 = vrcp.pop %v1179
        %v1181 = vmul.f32 %v1176, %v1180
        %1182 = vrot.lane.b32.xlu0 %v1073, 56
        %v1183 = vpop.permute.xlu0 %1182
        %v1186 = vsel %vm594, %v1181, 0
        %1188 = vmatpush.msra.mxu0 0.0
        %1189 = vmatpush.msra.mxu0 0.0
        %1190 = vmatpush.msra.mxu0 0.0
        %1191 = vmatpush.msra.mxu0 0.0
        %1192 = vmatpush.msra.mxu0 0.0
        %1193 = vmatpush.msra.mxu0 0.0
        %1194 = vmatpush.msra.mxu0 0.0
        %1195 = vmatpush.msra.mxu0 0.0
        %1196 = vmatpush.msra.mxu0 0.0
        %1197 = vmatpush.msra.mxu0 0.0
        %1198 = vmatpush.msra.mxu0 0.0
        %1199 = vmatpush.msra.mxu0 0.0
        %1200 = vmatpush.msra.mxu0 0.0
        %1201 = vmatpush.msra.mxu0 0.0
        %1202 = vmatpush.msra.mxu0 0.0
        %1203 = vmatpush.msra.mxu0 %v1183
        %1204 = vmatmul.f32.gmra.mxu0 %v1186
        %v1205 = vpop.f32.mrf.mxu0
        %v1206 = vadd.f32 0.0, %v1205
        %1207 = vdwg.mxu0
        %1208 = vrot.lane.b32.xlu0 %v1073, 112
        %v1209 = vpop.permute.xlu0 %1208
        %1210 = vrot.lane.b32.xlu0 %v1073, 80
        %v1211 = vpop.permute.xlu0 %1210
        %v1212 = vsel %vm594, %v1209, 0
        %v1214 = vsel %vm594, %v1211, 0
        %1216 = vmatpush.xpose.msra.mxu0 0.0
        %1217 = vmatpush.xpose.msra.mxu0 0.0
        %1218 = vmatpush.xpose.msra.mxu0 0.0
        %1219 = vmatpush.xpose.msra.mxu0 0.0
        %1220 = vmatpush.xpose.msra.mxu0 0.0
        %1221 = vmatpush.xpose.msra.mxu0 0.0
        %1222 = vmatpush.xpose.msra.mxu0 0.0
        %1223 = vmatpush.xpose.msra.mxu0 0.0
        %1224 = vmatpush.xpose.msra.mxu0 0.0
        %1225 = vmatpush.xpose.msra.mxu0 0.0
        %1226 = vmatpush.xpose.msra.mxu0 0.0
        %1227 = vmatpush.xpose.msra.mxu0 0.0
        %1228 = vmatpush.xpose.msra.mxu0 0.0
        %1229 = vmatpush.xpose.msra.mxu0 0.0
        %1230 = vmatpush.xpose.msra.mxu0 0.0
        %1231 = vmatpush.xpose.msra.mxu0 %v1214
        %1232 = vmatmul.f32.gmra.mxu0 %v1212
        %v1233 = vpop.f32.mrf.mxu0
        %v1234 = vadd.f32 0.0, %v1233
        %1235 = vdwg.mxu0
        %v1236 = vmul.f32 %v1234, 0.17677669
        %v1237 = vadd.f32 %v1236, %v523
        %v1238 = vsel %vm594, %v1237, -inf
        %1239 = vmax.xlane.f32.xlu0 %v1238
        %v1240 = vpop.xlane.xlu0 %1239
        %v1241 = vsub.f32 %v1237, %v1240
        %v1242 = vmul.f32 %v1241, 1.442695
        %v1243 = vpow.pop %v1242
        %v1244 = vsel %vm594, %v1243, 0.0
        %1245 = vadd.xlane.f32.xlu0 %v1244
        %v1246 = vpop.xlane.xlu0 %1245
        %v1247 = vrcp.pop %v1246
        %v1248 = vmul.f32 %v1243, %v1247
        %1249 = vrot.lane.b32.xlu0 %v1073, 48
        %v1250 = vpop.permute.xlu0 %1249
        %v1253 = vsel %vm594, %v1248, 0
        %1255 = vmatpush.msra.mxu0 0.0
        %1256 = vmatpush.msra.mxu0 0.0
        %1257 = vmatpush.msra.mxu0 0.0
        %1258 = vmatpush.msra.mxu0 0.0
        %1259 = vmatpush.msra.mxu0 0.0
        %1260 = vmatpush.msra.mxu0 0.0
        %1261 = vmatpush.msra.mxu0 0.0
        %1262 = vmatpush.msra.mxu0 0.0
        %1263 = vmatpush.msra.mxu0 0.0
        %1264 = vmatpush.msra.mxu0 0.0
        %1265 = vmatpush.msra.mxu0 0.0
        %1266 = vmatpush.msra.mxu0 0.0
        %1267 = vmatpush.msra.mxu0 0.0
        %1268 = vmatpush.msra.mxu0 0.0
        %1269 = vmatpush.msra.mxu0 0.0
        %1270 = vmatpush.msra.mxu0 %v1250
        %1271 = vmatmul.f32.gmra.mxu0 %v1253
        %v1272 = vpop.f32.mrf.mxu0
        %v1273 = vadd.f32 0.0, %v1272
        %1274 = vdwg.mxu0
        %1275 = vrot.lane.b32.xlu0 %v1073, 104
        %v1276 = vpop.permute.xlu0 %1275
        %1277 = vrot.lane.b32.xlu0 %v1073, 72
        %v1278 = vpop.permute.xlu0 %1277
        %v1279 = vsel %vm594, %v1276, 0
        %v1281 = vsel %vm594, %v1278, 0
        %1283 = vmatpush.xpose.msra.mxu0 0.0
        %1284 = vmatpush.xpose.msra.mxu0 0.0
        %1285 = vmatpush.xpose.msra.mxu0 0.0
        %1286 = vmatpush.xpose.msra.mxu0 0.0
        %1287 = vmatpush.xpose.msra.mxu0 0.0
        %1288 = vmatpush.xpose.msra.mxu0 0.0
        %1289 = vmatpush.xpose.msra.mxu0 0.0
        %1290 = vmatpush.xpose.msra.mxu0 0.0
        %1291 = vmatpush.xpose.msra.mxu0 0.0
        %1292 = vmatpush.xpose.msra.mxu0 0.0
        %1293 = vmatpush.xpose.msra.mxu0 0.0
        %1294 = vmatpush.xpose.msra.mxu0 0.0
        %1295 = vmatpush.xpose.msra.mxu0 0.0
        %1296 = vmatpush.xpose.msra.mxu0 0.0
        %1297 = vmatpush.xpose.msra.mxu0 0.0
        %1298 = vmatpush.xpose.msra.mxu0 %v1281
        %1299 = vmatmul.f32.gmra.mxu0 %v1279
        %v1300 = vpop.f32.mrf.mxu0
        %v1301 = vadd.f32 0.0, %v1300
        %1302 = vdwg.mxu0
        %v1303 = vmul.f32 %v1301, 0.17677669
        %v1304 = vadd.f32 %v1303, %v523
        %v1305 = vsel %vm594, %v1304, -inf
        %1306 = vmax.xlane.f32.xlu0 %v1305
        %v1307 = vpop.xlane.xlu0 %1306
        %v1308 = vsub.f32 %v1304, %v1307
        %v1309 = vmul.f32 %v1308, 1.442695
        %v1310 = vpow.pop %v1309
        %v1311 = vsel %vm594, %v1310, 0.0
        %1312 = vadd.xlane.f32.xlu0 %v1311
        %v1313 = vpop.xlane.xlu0 %1312
        %v1314 = vrcp.pop %v1313
        %v1315 = vmul.f32 %v1310, %v1314
        %1316 = vrot.lane.b32.xlu0 %v1073, 40
        %v1317 = vpop.permute.xlu0 %1316
        %v1320 = vsel %vm594, %v1315, 0
        %1322 = vmatpush.msra.mxu0 0.0
        %1323 = vmatpush.msra.mxu0 0.0
        %1324 = vmatpush.msra.mxu0 0.0
        %1325 = vmatpush.msra.mxu0 0.0
        %1326 = vmatpush.msra.mxu0 0.0
        %1327 = vmatpush.msra.mxu0 0.0
        %1328 = vmatpush.msra.mxu0 0.0
        %1329 = vmatpush.msra.mxu0 0.0
        %1330 = vmatpush.msra.mxu0 0.0
        %1331 = vmatpush.msra.mxu0 0.0
        %1332 = vmatpush.msra.mxu0 0.0
        %1333 = vmatpush.msra.mxu0 0.0
        %1334 = vmatpush.msra.mxu0 0.0
        %1335 = vmatpush.msra.mxu0 0.0
        %1336 = vmatpush.msra.mxu0 0.0
        %1337 = vmatpush.msra.mxu0 %v1317
        %1338 = vmatmul.f32.gmra.mxu0 %v1320
        %v1339 = vpop.f32.mrf.mxu0
        %v1340 = vadd.f32 0.0, %v1339
        %1341 = vdwg.mxu0
        %1343 = vrot.lane.b32.xlu0 %v1206, 8
        %v1344 = vpop.permute.xlu0 %1343
        %1347 = vrot.lane.b32.xlu0 %v1273, 16
        %v1348 = vpop.permute.xlu0 %1347
        %1351 = vrot.lane.b32.xlu0 %v1340, 24
        %v1352 = vpop.permute.xlu0 %1351
        %v1354 = vsel %vm594, %v1139, %v1344
        %v1355 = vsel %vm872, %v1354, %v1348
        %v1356 = vsel %vm874, %v1355, %v1352
        %s1357 = scalar_lea.vmem %s4, 32
        %v1358 = vld [vmem:[%s1357] sm:$0xff]
        %v1359 = vld [vmem:[%s1357 + $0x8] sm:$0xff]
        %v1360 = vld [vmem:[%s1357 + $0x10] sm:$0xff]
        %v1361 = vld [vmem:[%s1357 + $0x18] sm:$0xff]
        %s1362 = scalar_lea.vmem %s5, 1
        %v1363 = vld [vmem:[%s1362] sm:$0x1]
        %v1365 = vperm.slane %v1363, 0
        %v1368 = vsel %vm526, %v1356, 0
        %1370 = vmatpush.msra.mxu0 0.0
        %1371 = vmatpush.msra.mxu0 0.0
        %1372 = vmatpush.msra.mxu0 0.0
        %1373 = vmatpush.msra.mxu0 0.0
        %1374 = vmatpush.msra.mxu0 0.0
        %1375 = vmatpush.msra.mxu0 0.0
        %1376 = vmatpush.msra.mxu0 0.0
        %1377 = vmatpush.msra.mxu0 0.0
        %1378 = vmatpush.msra.mxu0 0.0
        %1379 = vmatpush.msra.mxu0 0.0
        %1380 = vmatpush.msra.mxu0 0.0
        %1381 = vmatpush.msra.mxu0 0.0
        %1382 = vmatpush.msra.mxu0 %v1361
        %1383 = vmatpush.msra.mxu0 %v1360
        %1384 = vmatpush.msra.mxu0 %v1359
        %1385 = vmatpush.msra.mxu0 %v1358
        %1386 = vmatmul.f32.gmra.mxu0 %v1368
        %v1387 = vpop.f32.mrf.mxu0
        %v1388 = vadd.f32 %v1365, %v1387
        %1389 = vdwg.mxu0
        %v1390 = vadd.f32 %v1012, %v1388
        %s1391 = scalar_lea.vmem %s6, 1
        %v1392 = vld [vmem:[%s1391] sm:$0x1]
        %s1393 = scalar_lea.vmem %s7, 1
        %v1394 = vld [vmem:[%s1393] sm:$0x1]
        %v1395 = vsel %vm526, %v1390, 0.0
        %1396 = vadd.xlane.f32.xlu0 %v1395
        %v1397 = vpop.xlane.xlu0 %1396
        %v1398 = vmul.f32 %v1397, %v536
        %v1399 = vsub.f32 %v1390, %v1398
        %v1400 = vmul.f32 %v1399, %v1399
        %v1401 = vsel %vm526, %v1400, 0.0
        %1402 = vadd.xlane.f32.xlu0 %v1401
        %v1403 = vpop.xlane.xlu0 %1402
        %v1404 = vmul.f32 %v1403, %v536
        %v1405 = vadd.f32 %v1404, 1e-05
        %v1406 = vrsqrt.pop %v1405
        %v1407 = vmul.f32 %v1406, %v1405
        %v1408 = vmul.f32 %v1407, %v1406
        %v1409 = vmul.f32 0.5, %v1408
        %v1410 = vsub.f32 1.5, %v1409
        %v1411 = vmul.f32 %v1406, %v1410
        %vm1412 = vweird.f32 %v1405
        %vm1413 = vweird.f32 %v1406
        %vm1414 = vmor %vm1412, %vm1413
        %v1415 = vsel %vm1414, %v1406, %v1411
        %v1416 = vmul.f32 %v1399, %v1415
        %v1418 = vperm.slane %v1392, 0
        %v1420 = vmul.f32 %v1416, %v1418
        %v1422 = vperm.slane %v1394, 0
        %v1424 = vadd.f32 %v1420, %v1422
        %s1425 = scalar_lea.vmem %s8, 32
        %v1426 = vld [vmem:[%s1425] sm:$0xff]
        %v1427 = vld [vmem:[%s1425 + $0x8] sm:$0xff]
        %v1428 = vld [vmem:[%s1425 + $0x10] sm:$0xff]
        %v1429 = vld [vmem:[%s1425 + $0x18] sm:$0xff]
        %s1430 = scalar_lea.vmem %s9, 1
        %v1431 = vld [vmem:[%s1430] sm:$0x1]
        %v1433 = vperm.slane %v1431, 0
        %v1436 = vsel %vm526, %v1424, 0
        %1438 = vmatpush.msra.mxu0 0.0
        %1439 = vmatpush.msra.mxu0 0.0
        %1440 = vmatpush.msra.mxu0 0.0
        %1441 = vmatpush.msra.mxu0 0.0
        %1442 = vmatpush.msra.mxu0 0.0
        %1443 = vmatpush.msra.mxu0 0.0
        %1444 = vmatpush.msra.mxu0 0.0
        %1445 = vmatpush.msra.mxu0 0.0
        %1446 = vmatpush.msra.mxu0 0.0
        %1447 = vmatpush.msra.mxu0 0.0
        %1448 = vmatpush.msra.mxu0 0.0
        %1449 = vmatpush.msra.mxu0 0.0
        %1450 = vmatpush.msra.mxu0 %v1429
        %1451 = vmatpush.msra.mxu0 %v1428
        %1452 = vmatpush.msra.mxu0 %v1427
        %1453 = vmatpush.msra.mxu0 %v1426
        %1454 = vmatmul.f32.gmra.mxu0 %v1436
        %v1455 = vpop.f32.mrf.mxu0
        %v1456 = vadd.f32 %v1433, %v1455
        %1457 = vdwg.mxu0
        %v1458 = vmax.f32 %v1456, 0.0
        %s1459 = scalar_lea.vmem %s10, 128
        %v1460 = vld [vmem:[%s1459] sm:$0xff]
        %v1461 = vld [vmem:[%s1459 + $0x8] sm:$0xff]
        %v1462 = vld [vmem:[%s1459 + $0x10] sm:$0xff]
        %v1463 = vld [vmem:[%s1459 + $0x18] sm:$0xff]
        %v1464 = vld [vmem:[%s1459 + $0x20] sm:$0xff]
        %v1465 = vld [vmem:[%s1459 + $0x28] sm:$0xff]
        %v1466 = vld [vmem:[%s1459 + $0x30] sm:$0xff]
        %v1467 = vld [vmem:[%s1459 + $0x38] sm:$0xff]
        %v1468 = vld [vmem:[%s1459 + $0x40] sm:$0xff]
        %v1469 = vld [vmem:[%s1459 + $0x48] sm:$0xff]
        %v1470 = vld [vmem:[%s1459 + $0x50] sm:$0xff]
        %v1471 = vld [vmem:[%s1459 + $0x58] sm:$0xff]
        %v1472 = vld [vmem:[%s1459 + $0x60] sm:$0xff]
        %v1473 = vld [vmem:[%s1459 + $0x68] sm:$0xff]
        %v1474 = vld [vmem:[%s1459 + $0x70] sm:$0xff]
        %v1475 = vld [vmem:[%s1459 + $0x78] sm:$0xff]
        %s1476 = scalar_lea.vmem %s11, 1
        %v1477 = vld [vmem:[%s1476] sm:$0x1]
        %v1479 = vperm.slane %v1477, 0
        %1481 = vmatpush.msra.mxu0 %v1475
        %1482 = vmatpush.msra.mxu0 %v1474
        %1483 = vmatpush.msra.mxu0 %v1473
        %1484 = vmatpush.msra.mxu0 %v1472
        %1485 = vmatpush.msra.mxu0 %v1471
        %1486 = vmatpush.msra.mxu0 %v1470
        %1487 = vmatpush.msra.mxu0 %v1469
        %1488 = vmatpush.msra.mxu0 %v1468
        %1489 = vmatpush.msra.mxu0 %v1467
        %1490 = vmatpush.msra.mxu0 %v1466
        %1491 = vmatpush.msra.mxu0 %v1465
        %1492 = vmatpush.msra.mxu0 %v1464
        %1493 = vmatpush.msra.mxu0 %v1463
        %1494 = vmatpush.msra.mxu0 %v1462
        %1495 = vmatpush.msra.mxu0 %v1461
        %1496 = vmatpush.msra.mxu0 %v1460
        %1497 = vmatmul.f32.gmra.mxu0 %v1458
        %v1498 = vpop.f32.mrf.mxu0
        %v1499 = vadd.f32 %v1479, %v1498
        %1500 = vdwg.mxu0
        %v1501 = vadd.f32 %v1390, %v1499
        %v1502 = vld [vmem:[%s12] sm:$0x1]
        %v1503 = vld [vmem:[%s13] sm:$0x1]
        %v1504 = vsel %vm526, %v1501, 0.0
        %1505 = vadd.xlane.f32.xlu0 %v1504
        %v1506 = vpop.xlane.xlu0 %1505
        %v1507 = vmul.f32 %v1506, %v536
        %v1508 = vsub.f32 %v1501, %v1507
        %v1509 = vmul.f32 %v1508, %v1508
        %v1510 = vsel %vm526, %v1509, 0.0
        %1511 = vadd.xlane.f32.xlu0 %v1510
        %v1512 = vpop.xlane.xlu0 %1511
        %v1513 = vmul.f32 %v1512, %v536
        %v1514 = vadd.f32 %v1513, 1e-05
        %v1515 = vrsqrt.pop %v1514
        %v1516 = vmul.f32 %v1515, %v1514
        %v1517 = vmul.f32 %v1516, %v1515
        %v1518 = vmul.f32 0.5, %v1517
        %v1519 = vsub.f32 1.5, %v1518
        %v1520 = vmul.f32 %v1515, %v1519
        %vm1521 = vweird.f32 %v1514
        %vm1522 = vweird.f32 %v1515
        %vm1523 = vmor %vm1521, %vm1522
        %v1524 = vsel %vm1523, %v1515, %v1520
        %v1525 = vmul.f32 %v1508, %v1524
        %v1527 = vperm.slane %v1502, 0
        %v1529 = vmul.f32 %v1525, %v1527
        %v1531 = vperm.slane %v1503, 0
        %v1533 = vadd.f32 %v1529, %v1531
        %v1534 = vld [vmem:[%s14] sm:$0xff]
        %v1535 = vld [vmem:[%s14 + $0x8] sm:$0xff]
        %v1536 = vld [vmem:[%s14 + $0x10] sm:$0xff]
        %v1537 = vld [vmem:[%s14 + $0x18] sm:$0xff]
        %v1538 = vld [vmem:[%s15] sm:$0x1]
        %v1540 = vperm.slane %v1538, 0
        %v1543 = vsel %vm526, %v1533, 0
        %1545 = vmatpush.msra.mxu0 0.0
        %1546 = vmatpush.msra.mxu0 0.0
        %1547 = vmatpush.msra.mxu0 0.0
        %1548 = vmatpush.msra.mxu0 0.0
        %1549 = vmatpush.msra.mxu0 0.0
        %1550 = vmatpush.msra.mxu0 0.0
        %1551 = vmatpush.msra.mxu0 0.0
        %1552 = vmatpush.msra.mxu0 0.0
        %1553 = vmatpush.msra.mxu0 0.0
        %1554 = vmatpush.msra.mxu0 0.0
        %1555 = vmatpush.msra.mxu0 0.0
        %1556 = vmatpush.msra.mxu0 0.0
        %1557 = vmatpush.msra.mxu0 %v1537
        %1558 = vmatpush.msra.mxu0 %v1536
        %1559 = vmatpush.msra.mxu0 %v1535
        %1560 = vmatpush.msra.mxu0 %v1534
        %1561 = vmatmul.f32.gmra.mxu0 %v1543
        %v1562 = vpop.f32.mrf.mxu0
        %v1563 = vadd.f32 %v1540, %v1562
        %1564 = vdwg.mxu0
        %1565 = vst [vmem:[%s512] sm:$0xff] %v1563
        %s1566 = sand.u32 %s379, 1
        %s1567 = scalar_lea.sflag [#allocation3], %s1566
        %s1568 = sand.u32 %s379, 1
        %s1569 = smul.addr %s1568, 8
        %s1570 = scalar_lea.vmem [#allocation2], %s1569
        // Predicated region
        $region85: #{gpt_forward.1} parent=83 // pred_check
          %p1571 = pneg %p389
        $region86: #{gpt_forward.1} parent=83 // pred_check_branch
          %1573 = sbr.rel (%p1571) target = $region88
        $region87: #{gpt_forward.1} parent=83 // pred_region
          %1575 = vsyncadd %s1567, 0
          %s1576 = smul.addr %s30, 8
          %s1577 = scalar_lea.hbm %s16, %s1576
          %s1579 = sshll.u32 %s1570, 4
          %s1580 = int_to_ptr.vmem [resolvable:$true] %s1579
          %s1581 = sshll.u32 %s1577, 4
          %s1582 = int_to_ptr.hbm [resolvable:$true] %s1581
          %1584 = dma.vmem_to_hbm [thread:$0]  %s1580, 128, %s1582, %s1567
        $region88: #{gpt_forward.1} parent=83 // pred_fallthru
          _
      $region84: #{gpt_forward.1} parent=5 // pred_fallthru
        _
      %p1585 = scmp.le.s32.totalorder 2, %s25
      // Predicated region
      $region89: #{gpt_forward.1} parent=5 // pred_check
        %p1586 = pneg %p1585
      $region90: #{gpt_forward.1} parent=5 // pred_check_branch
        %1588 = sbr.rel (%p1586) target = $region92
      $region91: #{gpt_forward.1} parent=5 // pred_region
        %s1589 = ssub.s32 %s25, 2
        // Predicated region
        $region93: #{gpt_forward.1} parent=91 // pred_check
          %p1590 = pneg %p395
        $region94: #{gpt_forward.1} parent=91 // pred_check_branch
          %1592 = sbr.rel (%p1590) target = $region96
        $region95: #{gpt_forward.1} parent=91 // pred_region
          %s1593 = sand.u32 %s380, 1
          %s1594 = scalar_lea.sflag [#allocation3], %s1593
          %s1595 = sand.u32 %s380, 1
          %s1596 = smul.addr %s1595, 8
          %s1597 = scalar_lea.vmem [#allocation2], %s1596
          %1599 = dma.done %s1594, 128
        $region96: #{gpt_forward.1} parent=91 // pred_fallthru
          _
      $region92: #{gpt_forward.1} parent=5 // pred_fallthru
        _
    $region6: #{gpt_forward.1} parent=1 // loop_footer
      %s29 = sadd.s32 1, %s25
    $region7: #{gpt_forward.1} parent=1 // loop_footer_branch
      %24 = sbr.rel target = $region3
    $region8: #{gpt_forward.1} parent=1 // loop_exit
      _
    %1600 = vsyncpa [#allocation3], 1
    %s1601 = scalar_lea.sflag [#allocation3], 1
    %1602 = vsyncpa %s1601, 1

</llo_original>
